<compile_context>
chip_gen: v7x
topology: tpu7x:2x2x1
jax: 0.10.0
libtpu: 0.0.40
codegen_flags: <defaults>
</compile_context>

<pallas_src>
import functools

import jax
import jax.numpy as jnp
from jax import lax
from jax.experimental import pallas as pl
from jax.experimental.pallas import tpu as pltpu

LANE = 128  # TPU lane width


def _round_up(x, m):
    return ((x + m - 1) // m) * m


# ----------------------------------------------------------------------------
# Fused stacked-BiLSTM kernel.  grid = (num_layers,), scratch persists across
# layers (ping-pong activation buffer).
#
#   x_ref   : [T, ACT_W]  f32      lane-padded layer-0 input (resident)
#   wih_ref : [1, ACT_W, 2*DP] cdt this layer's packed input weights
#   whh_ref : [1, 2*H, 2*DP]   cdt this layer's packed block-diag recurrent W
#   b_ref   : [1, 1, 2*DP]     f32 this layer's packed bias (b_ih + b_hh)
#   out_ref : [T, ACT_W]  f32      padded output slab (written on last layer)
#   act_sc  : [2, T, ACT_W] f32    activation ping-pong buffer
#   xg_sc   : [T, 2*DP]     f32    per-layer precomputed input-side gates
#
# Dense packed gate layout: direction d (0=fwd, 1=bwd) occupies lanes
# [d*DP, d*DP + 4H) with per-direction gate order [i, f, o, g]; pad lanes
# [d*DP + 4H, (d+1)*DP) are exactly zero.
# Activation layout: fwd h in lanes [0, H), bwd h in lanes [H, 2H), pad 0.
# ----------------------------------------------------------------------------
def bilstm_stack_kernel(x_ref, wih_ref, whh_ref, b_ref, out_ref,
                        act_sc, xg_sc):
    T = x_ref.shape[0]
    H = whh_ref.shape[1] // 2          # true hidden size
    DP = whh_ref.shape[2] // 2         # dense per-direction gate block width
    cdt = wih_ref.dtype                # matmul operand dtype (bf16 or f32)

    layer = pl.program_id(0)
    num_layers = pl.num_programs(0)
    r_slot = layer % 2                 # slot holding this layer's input
    w_slot = 1 - r_slot                # slot receiving this layer's output

    # Layer 0: zero both activation slots once.  Lanes [2H, ACT_W) are never
    # written by the time loop, so this guarantees the zero lane padding that
    # later layers' input matmuls rely on (their wih rows there are zero, but
    # NaN garbage * 0 would still poison the accumulate).
    @pl.when(layer == 0)
    def _():
        act_sc[...] = jnp.zeros(act_sc.shape, act_sc.dtype)

    # Input-side gate pre-activations for the whole sequence: one MXU matmul.
    # Layer 0 reads the lane-padded input straight from x_ref -> no staging
    # copy of x into the ping-pong buffer.
    @pl.when(layer == 0)
    def _():
        xg_sc[...] = jnp.dot(x_ref[...].astype(cdt), wih_ref[0],
                             preferred_element_type=jnp.float32) + b_ref[0]

    @pl.when(layer != 0)
    def _():
        xg_sc[...] = jnp.dot(act_sc[r_slot].astype(cdt), wih_ref[0],
                             preferred_element_type=jnp.float32) + b_ref[0]

    whh = whh_ref[0]                   # [2H, 2*DP] block-diagonal, hoisted
    # TODO(synk): make whh MXU-resident across the time loop via
    # pltpu.matmul_push_rhs / matmul_acc_lhs / matmul_pop (it now fits a
    # single 256-column weight tile); jnp.dot re-streams it every step.

    def cell(g, c_prev):
        # Packed gate order [i, f, o | g]: one sigmoid over 3H contiguous
        # lanes + one tanh (2 EUP pushes instead of 4).  All math in f32.
        sig = jax.nn.sigmoid(g[:, 0:3 * H])
        i = sig[:, 0:H]
        f = sig[:, H:2 * H]
        o = sig[:, 2 * H:3 * H]
        gg = jnp.tanh(g[:, 3 * H:4 * H])
        c = f * c_prev + i * gg
        return o * jnp.tanh(c), c

    def step(s, carry):
        h_cat, c_f, c_b = carry        # [1,2H], [1,H], [1,H] f32 registers
        # Single MXU push per step covers the recurrence of BOTH directions.
        rec = jnp.dot(h_cat.astype(cdt), whh,
                      preferred_element_type=jnp.float32)        # [1, 2*DP]
        gf = xg_sc[pl.ds(s, 1), 0:DP] + rec[:, 0:DP]
        gb = xg_sc[pl.ds(T - 1 - s, 1), DP:2 * DP] + rec[:, DP:2 * DP]

        h_f, c_f = cell(gf, c_f)
        h_b, c_b = cell(gb, c_b)

        # Dense activation layout: fwd output row s lanes [0,H), bwd output
        # row T-1-s lanes [H,2H).
        # TODO(synk): coalesce 8 timesteps of h into (8,128) block stores.
        act_sc[w_slot, pl.ds(s, 1), 0:H] = h_f
        act_sc[w_slot, pl.ds(T - 1 - s, 1), H:2 * H] = h_b
        return (jnp.concatenate([h_f, h_b], axis=1), c_f, c_b)

    h0 = jnp.zeros((1, 2 * H), jnp.float32)
    c0 = jnp.zeros((1, H), jnp.float32)
    # Partial unroll keeps LLO visibility without exploding code size for
    # large T (full unroll only when T <= 8).
    lax.fori_loop(0, T, step, (h0, c0, c0), unroll=min(T, 8))

    # Last layer: one dense, lane-aligned [T, ACT_W] store.  The [h_f|h_b]
    # concat already lives in lanes [0, 2H); the wrapper strips the padding.
    @pl.when(layer == num_layers - 1)
    def _():
        out_ref[...] = act_sc[w_slot].astype(out_ref.dtype)


# ----------------------------------------------------------------------------
# Host-side one-time weight packing: pre-transpose, dense-pack gates, reorder
# gates to [i, f, o, g], pre-sum bias, cast matmul operands to compute_dtype.
# ----------------------------------------------------------------------------
def pack_bilstm_params(lstm_params, hidden, compute_dtype=jnp.bfloat16):
    H = hidden
    DP = _round_up(4 * H, LANE)                 # dense per-direction block
    gates_w = 2 * DP
    d_in0 = lstm_params[0][0]["w_ih"].shape[1]
    act_w = _round_up(max(2 * H, d_in0), LANE)
    L = len(lstm_params)

    # packed slot order [i, f, o, g] <- PyTorch source gate order [i, f, g, o]
    gate_perm = (0, 1, 3, 2)

    wih = jnp.zeros((L, act_w, gates_w), jnp.float32)
    whh = jnp.zeros((L, 2 * H, gates_w), jnp.float32)
    bias = jnp.zeros((L, 1, gates_w), jnp.float32)

    for l, dirs in enumerate(lstm_params):
        for d, p in enumerate(dirs):            # d=0 forward, d=1 backward
            w_ih = p["w_ih"].astype(jnp.float32)          # [4H, Din_l]
            w_hh = p["w_hh"].astype(jnp.float32)          # [4H, H]
            b = (p["b_ih"] + p["b_hh"]).astype(jnp.float32)
            d_in = w_ih.shape[1]
            for slot, g_src in enumerate(gate_perm):
                col0 = d * DP + slot * H
                wg_ih = w_ih[g_src * H:(g_src + 1) * H, :].T   # [Din_l, H]
                wg_hh = w_hh[g_src * H:(g_src + 1) * H, :].T   # [H, H]
                # Layer-0 input lives in lanes [0, Din0); layer l>0 input is
                # the dense activation [h_f | h_b] in lanes [0, 2H) -> same
                # feature order as PyTorch, so a direct row copy works.
                wih = wih.at[l, 0:d_in, col0:col0 + H].set(wg_ih)
                whh = whh.at[l, d * H:(d + 1) * H, col0:col0 + H].set(wg_hh)
                bias = bias.at[l, 0, col0:col0 + H].set(
                    b[g_src * H:(g_src + 1) * H])
    return {"w_ih": wih.astype(compute_dtype),   # MXU operand -> bf16
            "w_hh": whh.astype(compute_dtype),   # MXU operand -> bf16
            "bias": bias,                        # added post-accumulate, f32
            "hidden": H}


# ----------------------------------------------------------------------------
# Wrapper: embedding lookup + concat (tiny XLA glue) then one pallas_call.
# ----------------------------------------------------------------------------
def bilstm_forward_pallas(packed, x_seq):
    wih, whh, bias = packed["w_ih"], packed["w_hh"], packed["bias"]
    H = packed["hidden"]
    L, act_w, gates_w = wih.shape
    T, d_in = x_seq.shape

    x_pad = jnp.pad(x_seq.astype(jnp.float32), ((0, 0), (0, act_w - d_in)))

    out_padded = pl.pallas_call(
        bilstm_stack_kernel,
        out_shape=jax.ShapeDtypeStruct((T, act_w), jnp.float32),
        grid=(L,),
        in_specs=[
            # x and out have constant index maps (grid-invariant, a few KB);
            # per-layer weights are the only blocks that actually pipeline.
            pl.BlockSpec((T, act_w), lambda l: (0, 0)),
            pl.BlockSpec((1, act_w, gates_w), lambda l: (l, 0, 0)),
            pl.BlockSpec((1, 2 * H, gates_w), lambda l: (l, 0, 0)),
            pl.BlockSpec((1, 1, gates_w), lambda l: (l, 0, 0)),
        ],
        out_specs=pl.BlockSpec((T, act_w), lambda l: (0, 0)),
        scratch_shapes=[
            pltpu.VMEM((2, T, act_w), jnp.float32),   # activation ping-pong
            pltpu.VMEM((T, gates_w), jnp.float32),    # per-layer input gates
        ],
        compiler_params=pltpu.CompilerParams(
            dimension_semantics=("arbitrary",),
            vmem_limit_bytes=32 * 1024 * 1024),       # safe on v5e/v6e/v7x
    )(x_pad, wih, whh, bias)
    # Lane-dense slab out of the kernel; strip padding here (cheap XLA slice).
    return out_padded[:, :2 * H]


def encoder_bilstm_forward(params, packed, words_embeddings, poss_indices):
    pos_emb = jnp.take(params["pos_embedding"], poss_indices, axis=0)
    seq = jnp.concatenate([words_embeddings, pos_emb], axis=1)   # [T, Din0]
    return bilstm_forward_pallas(packed, seq)


# ----------------------------------------------------------------------------
# Parameter init (PyTorch-like layouts) + pure-JAX reference for correctness.
# ----------------------------------------------------------------------------
def init_params(key, word_dim, pos_vocab, pos_dim, hidden, num_layers):
    params = {}
    k_emb, key = jax.random.split(key)
    params["pos_embedding"] = jax.random.normal(
        k_emb, (pos_vocab, pos_dim), jnp.float32)

    bound = 1.0 / jnp.sqrt(hidden)
    layers = []
    for layer in range(num_layers):
        in_dim = (word_dim + pos_dim) if layer == 0 else 2 * hidden
        dirs = []
        for _ in range(2):  # forward, backward
            key, k1, k2, k3, k4 = jax.random.split(key, 5)
            dirs.append({
                "w_ih": jax.random.uniform(k1, (4 * hidden, in_dim),
                                           jnp.float32, -bound, bound),
                "w_hh": jax.random.uniform(k2, (4 * hidden, hidden),
                                           jnp.float32, -bound, bound),
                "b_ih": jax.random.uniform(k3, (4 * hidden,),
                                           jnp.float32, -bound, bound),
                "b_hh": jax.random.uniform(k4, (4 * hidden,),
                                           jnp.float32, -bound, bound),
            })
        layers.append(dirs)
    params["lstm"] = layers
    return params


def _lstm_direction_ref(x, w_ih, w_hh, b_ih, b_hh):
    H = w_hh.shape[1]

    def cell(carry, x_t):
        h, c = carry
        gates = x_t @ w_ih.T + h @ w_hh.T + b_ih + b_hh
        i = jax.nn.sigmoid(gates[0 * H:1 * H])
        f = jax.nn.sigmoid(gates[1 * H:2 * H])
        g = jnp.tanh(gates[2 * H:3 * H])
        o = jax.nn.sigmoid(gates[3 * H:4 * H])
        c = f * c + i * g
        h = o * jnp.tanh(c)
        return (h, c), h

    init = (jnp.zeros((H,), jnp.float32), jnp.zeros((H,), jnp.float32))
    _, hs = lax.scan(cell, init, x)
    return hs


def encoder_bilstm_reference(params, words_embeddings, poss_indices):
    pos_emb = jnp.take(params["pos_embedding"], poss_indices, axis=0)
    x = jnp.concatenate([words_embeddings, pos_emb], axis=1)
    for fwd, bwd in params["lstm"]:
        h_fwd = _lstm_direction_ref(x, fwd["w_ih"], fwd["w_hh"],
                                    fwd["b_ih"], fwd["b_hh"])
        h_bwd = jnp.flip(
            _lstm_direction_ref(jnp.flip(x, 0), bwd["w_ih"], bwd["w_hh"],
                                bwd["b_ih"], bwd["b_hh"]), 0)
        x = jnp.concatenate([h_fwd, h_bwd], axis=1)
    return x


if __name__ == "__main__":
    word_embedding_dim = 24
    pos_vocab_size = 16
    pos_embedding_dim = 8
    hidden_size = 32
    num_layers = 2
    seq_len = 8

    key = jax.random.PRNGKey(0)
    k_params, k_words, k_pos = jax.random.split(key, 3)

    params = init_params(k_params, word_embedding_dim, pos_vocab_size,
                         pos_embedding_dim, hidden_size, num_layers)

    words_embeddings = jax.random.normal(
        k_words, (seq_len, word_embedding_dim), jnp.float32)
    poss_indices = jax.random.randint(
        k_pos, (seq_len,), 0, pos_vocab_size, jnp.int32)

    ref = encoder_bilstm_reference(params, words_embeddings, poss_indices)

    # 1) f32 operand mode: exact check of the dense packing / kernel math.
    packed_f32 = pack_bilstm_params(params["lstm"], hidden_size,
                                    compute_dtype=jnp.float32)
    fwd_f32 = jax.jit(functools.partial(encoder_bilstm_forward,
                                        params, packed_f32))
    out_f32 = jax.block_until_ready(fwd_f32(words_embeddings, poss_indices))
    assert out_f32.shape == (seq_len, 2 * hidden_size), out_f32.shape
    err_f32 = float(jnp.max(jnp.abs(out_f32 - ref)))
    assert jnp.allclose(out_f32, ref, atol=1e-4, rtol=1e-4), err_f32

    # 2) bf16 operand mode (production config): bf16 MXU path, f32 accum.
    packed_bf16 = pack_bilstm_params(params["lstm"], hidden_size,
                                     compute_dtype=jnp.bfloat16)
    fwd_bf16 = jax.jit(functools.partial(encoder_bilstm_forward,
                                         params, packed_bf16))
    out_bf16 = jax.block_until_ready(fwd_bf16(words_embeddings, poss_indices))
    assert out_bf16.shape == (seq_len, 2 * hidden_size), out_bf16.shape
    err_bf16 = float(jnp.max(jnp.abs(out_bf16 - ref)))
    assert jnp.allclose(out_bf16, ref, atol=3e-2, rtol=3e-2), err_bf16

    print("KERNEL_OK")
</pallas_src>

<mosaic_0001>
module attributes {stable_mosaic.version = 11 : i64} {
  func.func @bilstm_stack_kernel(%arg0: i32, %arg1: memref<8x128xf32, #tpu.memory_space<vmem>>, %arg2: memref<1x128x256xf32, #tpu.memory_space<vmem>>, %arg3: memref<1x64x256xf32, #tpu.memory_space<vmem>>, %arg4: memref<1x1x256xf32, #tpu.memory_space<vmem>>, %arg5: memref<8x128xf32, #tpu.memory_space<vmem>>, %arg6: memref<2x8x128xf32, #tpu.memory_space<vmem>>, %arg7: memref<8x256xf32, #tpu.memory_space<vmem>>) attributes {dimension_semantics = [#tpu.dimension_semantics<arbitrary>], iteration_bounds = array<i64: 2>, scalar_prefetch = 0 : i64, scratch_operands = 2 : i64, tpu.core_type = #tpu.core_type<tc>, window_params = [{pipeline_mode = #tpu.pipeline_mode<synchronous>, transform_indices = @transform_0, window_bounds = array<i64: 8, 128>}, {transform_indices = @transform_1, window_bounds = array<i64: 1, 128, 256>}, {transform_indices = @transform_2, window_bounds = array<i64: 1, 64, 256>}, {transform_indices = @transform_3, window_bounds = array<i64: 1, 1, 256>}, {pipeline_mode = #tpu.pipeline_mode<synchronous>, transform_indices = @transform_4, window_bounds = array<i64: 8, 128>}]} {
    %c2_i32 = arith.constant 2 : i32
    %c0_i32 = arith.constant 0 : i32
    %0 = arith.cmpi eq, %c2_i32, %c0_i32 : i32
    %c1_i32 = arith.constant 1 : i32
    %1 = arith.select %0, %c1_i32, %c2_i32 : i32
    %2 = arith.remsi %arg0, %1 : i32
    %c0_i32_0 = arith.constant 0 : i32
    %3 = arith.cmpi ne, %2, %c0_i32_0 : i32
    %c0_i32_1 = arith.constant 0 : i32
    %4 = arith.cmpi slt, %2, %c0_i32_1 : i32
    %c0_i32_2 = arith.constant 0 : i32
    %5 = arith.cmpi slt, %1, %c0_i32_2 : i32
    %6 = arith.xori %4, %5 : i1
    %7 = arith.andi %6, %3 : i1
    %8 = arith.addi %2, %1 : i32
    %9 = arith.select %7, %8, %2 : i32
    %c1_i32_3 = arith.constant 1 : i32
    %10 = arith.subi %c1_i32_3, %9 : i32
    %c0_i32_4 = arith.constant 0 : i32
    %11 = arith.cmpi eq, %arg0, %c0_i32_4 : i32
    %12 = arith.extui %11 : i1 to i32
    %c0_i32_5 = arith.constant 0 : i32
    %13 = arith.cmpi ne, %12, %c0_i32_5 : i32
    scf.if %13 {
      %cst_88 = arith.constant 0.000000e+00 : f32
      %459 = vector.broadcast %cst_88 : f32 to vector<2x8x128xf32>
      %c0_89 = arith.constant 0 : index
      %c0_90 = arith.constant 0 : index
      %c0_91 = arith.constant 0 : index
      %460 = vector.load %arg6[%c0_89, %c0_90, %c0_91] : memref<2x8x128xf32, #tpu.memory_space<vmem>>, vector<2x8x128xf32>
      tpu.vector_store %arg6[%c0_89, %c0_90, %c0_91], %459 {strides = array<i32>} : memref<2x8x128xf32, #tpu.memory_space<vmem>>, vector<2x8x128xf32>,
    } else {
    }
    %c0_i32_6 = arith.constant 0 : i32
    %14 = arith.cmpi eq, %arg0, %c0_i32_6 : i32
    %15 = arith.extui %14 : i1 to i32
    %c0_i32_7 = arith.constant 0 : i32
    %16 = arith.cmpi ne, %15, %c0_i32_7 : i32
    scf.if %16 {
      %c0_88 = arith.constant 0 : index
      %c0_89 = arith.constant 0 : index
      %459 = vector.load %arg1[%c0_88, %c0_89] : memref<8x128xf32, #tpu.memory_space<vmem>>, vector<8x128xf32>
      %c0_90 = arith.constant 0 : index
      %c0_91 = arith.constant 0 : index
      %c0_92 = arith.constant 0 : index
      %460 = vector.load %arg2[%c0_90, %c0_91, %c0_92] : memref<1x128x256xf32, #tpu.memory_space<vmem>>, vector<1x128x256xf32>
      %461 = vector.shape_cast %460 : vector<1x128x256xf32> to vector<128x256xf32>
      %cst_93 = arith.constant dense<0.000000e+00> : vector<8x256xf32>
      %462 = tpu.matmul %459, %461, %cst_93 {dimension_numbers = #tpu.dot_dimension_numbers<[1], [0], [0], [1], [0, 0, 1, 1], [], []>} : vector<8x128xf32>, vector<128x256xf32>, vector<8x256xf32> -> vector<8x256xf32>
      %c0_94 = arith.constant 0 : index
      %c0_95 = arith.constant 0 : index
      %c0_96 = arith.constant 0 : index
      %463 = vector.load %arg4[%c0_94, %c0_95, %c0_96] : memref<1x1x256xf32, #tpu.memory_space<vmem>>, vector<1x1x256xf32>
      %464 = vector.shape_cast %463 : vector<1x1x256xf32> to vector<1x256xf32>
      %465 = vector.broadcast %464 : vector<1x256xf32> to vector<8x256xf32>
      %466 = arith.addf %462, %465 : vector<8x256xf32>
      %c0_97 = arith.constant 0 : index
      %c0_98 = arith.constant 0 : index
      %467 = vector.load %arg7[%c0_97, %c0_98] : memref<8x256xf32, #tpu.memory_space<vmem>>, vector<8x256xf32>
      tpu.vector_store %arg7[%c0_97, %c0_98], %466 {strides = array<i32>} : memref<8x256xf32, #tpu.memory_space<vmem>>, vector<8x256xf32>,
    } else {
    }
    %c0_i32_8 = arith.constant 0 : i32
    %17 = arith.cmpi ne, %arg0, %c0_i32_8 : i32
    %18 = arith.extui %17 : i1 to i32
    %c0_i32_9 = arith.constant 0 : i32
    %19 = arith.cmpi ne, %18, %c0_i32_9 : i32
    scf.if %19 {
      %459 = arith.index_cast %9 : i32 to index
      %c0_88 = arith.constant 0 : index
      %c0_89 = arith.constant 0 : index
      %460 = vector.load %arg6[%459, %c0_88, %c0_89] : memref<2x8x128xf32, #tpu.memory_space<vmem>>, vector<1x8x128xf32>
      %461 = vector.shape_cast %460 : vector<1x8x128xf32> to vector<8x128xf32>
      %c0_90 = arith.constant 0 : index
      %c0_91 = arith.constant 0 : index
      %c0_92 = arith.constant 0 : index
      %462 = vector.load %arg2[%c0_90, %c0_91, %c0_92] : memref<1x128x256xf32, #tpu.memory_space<vmem>>, vector<1x128x256xf32>
      %463 = vector.shape_cast %462 : vector<1x128x256xf32> to vector<128x256xf32>
      %cst_93 = arith.constant dense<0.000000e+00> : vector<8x256xf32>
      %464 = tpu.matmul %461, %463, %cst_93 {dimension_numbers = #tpu.dot_dimension_numbers<[1], [0], [0], [1], [0, 0, 1, 1], [], []>} : vector<8x128xf32>, vector<128x256xf32>, vector<8x256xf32> -> vector<8x256xf32>
      %c0_94 = arith.constant 0 : index
      %c0_95 = arith.constant 0 : index
      %c0_96 = arith.constant 0 : index
      %465 = vector.load %arg4[%c0_94, %c0_95, %c0_96] : memref<1x1x256xf32, #tpu.memory_space<vmem>>, vector<1x1x256xf32>
      %466 = vector.shape_cast %465 : vector<1x1x256xf32> to vector<1x256xf32>
      %467 = vector.broadcast %466 : vector<1x256xf32> to vector<8x256xf32>
      %468 = arith.addf %464, %467 : vector<8x256xf32>
      %c0_97 = arith.constant 0 : index
      %c0_98 = arith.constant 0 : index
      %469 = vector.load %arg7[%c0_97, %c0_98] : memref<8x256xf32, #tpu.memory_space<vmem>>, vector<8x256xf32>
      tpu.vector_store %arg7[%c0_97, %c0_98], %468 {strides = array<i32>} : memref<8x256xf32, #tpu.memory_space<vmem>>, vector<8x256xf32>,
    } else {
    }
    %c0 = arith.constant 0 : index
    %c0_10 = arith.constant 0 : index
    %c0_11 = arith.constant 0 : index
    %20 = vector.load %arg3[%c0, %c0_10, %c0_11] : memref<1x64x256xf32, #tpu.memory_space<vmem>>, vector<1x64x256xf32>
    %21 = vector.shape_cast %20 : vector<1x64x256xf32> to vector<64x256xf32>
    %cst = arith.constant 0.000000e+00 : f32
    %22 = vector.broadcast %cst : f32 to vector<1x64xf32>
    %cst_12 = arith.constant 0.000000e+00 : f32
    %23 = vector.broadcast %cst_12 : f32 to vector<1x32xf32>
    %c0_i32_13 = arith.constant 0 : i32
    %cst_14 = arith.constant dense<0.000000e+00> : vector<1x256xf32>
    %24 = tpu.matmul %22, %21, %cst_14 {dimension_numbers = #tpu.dot_dimension_numbers<[1], [0], [0], [1], [0, 0, 1, 1], [], []>} : vector<1x64xf32>, vector<64x256xf32>, vector<1x256xf32> -> vector<1x256xf32>
    %25 = arith.index_cast %c0_i32_13 : i32 to index
    %c0_15 = arith.constant 0 : index
    %26 = vector.load %arg7[%25, %c0_15] : memref<8x256xf32, #tpu.memory_space<vmem>>, vector<1x128xf32>
    %27 = vector.extract_strided_slice %24 {offsets = [0, 0], sizes = [1, 128], strides = [1, 1]} : vector<1x256xf32> to vector<1x128xf32>
    %28 = arith.addf %26, %27 : vector<1x128xf32>
    %c7_i32 = arith.constant 7 : i32
    %29 = arith.subi %c7_i32, %c0_i32_13 : i32
    %30 = arith.index_cast %29 : i32 to index
    %c128 = arith.constant 128 : index
    %31 = vector.load %arg7[%30, %c128] : memref<8x256xf32, #tpu.memory_space<vmem>>, vector<1x128xf32>
    %32 = vector.extract_strided_slice %24 {offsets = [0, 128], sizes = [1, 128], strides = [1, 1]} : vector<1x256xf32> to vector<1x128xf32>
    %33 = arith.addf %31, %32 : vector<1x128xf32>
    %34 = vector.extract_strided_slice %28 {offsets = [0, 0], sizes = [1, 96], strides = [1, 1]} : vector<1x128xf32> to vector<1x96xf32>
    %35 = arith.negf %34 : vector<1x96xf32>
    %36 = math.exp %35 : vector<1x96xf32>
    %cst_16 = arith.constant 1.000000e+00 : f32
    %37 = vector.broadcast %cst_16 : f32 to vector<1x96xf32>
    %38 = arith.addf %37, %36 : vector<1x96xf32>
    %39 = arith.divf %37, %38 : vector<1x96xf32>
    %40 = vector.extract_strided_slice %39 {offsets = [0, 0], sizes = [1, 32], strides = [1, 1]} : vector<1x96xf32> to vector<1x32xf32>
    %41 = vector.extract_strided_slice %39 {offsets = [0, 32], sizes = [1, 32], strides = [1, 1]} : vector<1x96xf32> to vector<1x32xf32>
    %42 = vector.extract_strided_slice %39 {offsets = [0, 64], sizes = [1, 32], strides = [1, 1]} : vector<1x96xf32> to vector<1x32xf32>
    %43 = vector.extract_strided_slice %28 {offsets = [0, 96], sizes = [1, 32], strides = [1, 1]} : vector<1x128xf32> to vector<1x32xf32>
    %44 = math.tanh %43 : vector<1x32xf32>
    %45 = arith.mulf %41, %23 : vector<1x32xf32>
    %46 = arith.mulf %40, %44 : vector<1x32xf32>
    %47 = arith.addf %45, %46 : vector<1x32xf32>
    %48 = math.tanh %47 : vector<1x32xf32>
    %49 = arith.mulf %42, %48 : vector<1x32xf32>
    %50 = vector.extract_strided_slice %33 {offsets = [0, 0], sizes = [1, 96], strides = [1, 1]} : vector<1x128xf32> to vector<1x96xf32>
    %51 = arith.negf %50 : vector<1x96xf32>
    %52 = math.exp %51 : vector<1x96xf32>
    %cst_17 = arith.constant 1.000000e+00 : f32
    %53 = vector.broadcast %cst_17 : f32 to vector<1x96xf32>
    %54 = arith.addf %53, %52 : vector<1x96xf32>
    %55 = arith.divf %53, %54 : vector<1x96xf32>
    %56 = vector.extract_strided_slice %55 {offsets = [0, 0], sizes = [1, 32], strides = [1, 1]} : vector<1x96xf32> to vector<1x32xf32>
    %57 = vector.extract_strided_slice %55 {offsets = [0, 32], sizes = [1, 32], strides = [1, 1]} : vector<1x96xf32> to vector<1x32xf32>
    %58 = vector.extract_strided_slice %55 {offsets = [0, 64], sizes = [1, 32], strides = [1, 1]} : vector<1x96xf32> to vector<1x32xf32>
    %59 = vector.extract_strided_slice %33 {offsets = [0, 96], sizes = [1, 32], strides = [1, 1]} : vector<1x128xf32> to vector<1x32xf32>
    %60 = math.tanh %59 : vector<1x32xf32>
    %61 = arith.mulf %57, %23 : vector<1x32xf32>
    %62 = arith.mulf %56, %60 : vector<1x32xf32>
    %63 = arith.addf %61, %62 : vector<1x32xf32>
    %64 = math.tanh %63 : vector<1x32xf32>
    %65 = arith.mulf %58, %64 : vector<1x32xf32>
    %66 = arith.index_cast %10 : i32 to index
    %67 = arith.index_cast %c0_i32_13 : i32 to index
    %c0_18 = arith.constant 0 : index
    %68 = vector.load %arg6[%66, %67, %c0_18] : memref<2x8x128xf32, #tpu.memory_space<vmem>>, vector<1x1x32xf32>
    %69 = vector.shape_cast %68 : vector<1x1x32xf32> to vector<1x32xf32>
    %70 = vector.shape_cast %49 : vector<1x32xf32> to vector<1x1x32xf32>
    tpu.vector_store %arg6[%66, %67, %c0_18], %70 {strides = array<i32>} : memref<2x8x128xf32, #tpu.memory_space<vmem>>, vector<1x1x32xf32>,
    %c7_i32_19 = arith.constant 7 : i32
    %71 = arith.subi %c7_i32_19, %c0_i32_13 : i32
    %72 = arith.index_cast %10 : i32 to index
    %73 = arith.index_cast %71 : i32 to index
    %c32 = arith.constant 32 : index
    %74 = vector.load %arg6[%72, %73, %c32] : memref<2x8x128xf32, #tpu.memory_space<vmem>>, vector<1x1x32xf32>
    %75 = vector.shape_cast %74 : vector<1x1x32xf32> to vector<1x32xf32>
    %76 = vector.shape_cast %65 : vector<1x32xf32> to vector<1x1x32xf32>
    tpu.vector_store %arg6[%72, %73, %c32], %76 {strides = array<i32>} : memref<2x8x128xf32, #tpu.memory_space<vmem>>, vector<1x1x32xf32>,
    %77 = tpu.concatenate %49, %65 in 1 : vector<1x32xf32>, vector<1x32xf32> -> vector<1x64xf32>
    %c1_i32_20 = arith.constant 1 : i32
    %cst_21 = arith.constant dense<0.000000e+00> : vector<1x256xf32>
    %78 = tpu.matmul %77, %21, %cst_21 {dimension_numbers = #tpu.dot_dimension_numbers<[1], [0], [0], [1], [0, 0, 1, 1], [], []>} : vector<1x64xf32>, vector<64x256xf32>, vector<1x256xf32> -> vector<1x256xf32>
    %79 = arith.index_cast %c1_i32_20 : i32 to index
    %c0_22 = arith.constant 0 : index
    %80 = vector.load %arg7[%79, %c0_22] : memref<8x256xf32, #tpu.memory_space<vmem>>, vector<1x128xf32>
    %81 = vector.extract_strided_slice %78 {offsets = [0, 0], sizes = [1, 128], strides = [1, 1]} : vector<1x256xf32> to vector<1x128xf32>
    %82 = arith.addf %80, %81 : vector<1x128xf32>
    %c7_i32_23 = arith.constant 7 : i32
    %83 = arith.subi %c7_i32_23, %c1_i32_20 : i32
    %84 = arith.index_cast %83 : i32 to index
    %c128_24 = arith.constant 128 : index
    %85 = vector.load %arg7[%84, %c128_24] : memref<8x256xf32, #tpu.memory_space<vmem>>, vector<1x128xf32>
    %86 = vector.extract_strided_slice %78 {offsets = [0, 128], sizes = [1, 128], strides = [1, 1]} : vector<1x256xf32> to vector<1x128xf32>
    %87 = arith.addf %85, %86 : vector<1x128xf32>
    %88 = vector.extract_strided_slice %82 {offsets = [0, 0], sizes = [1, 96], strides = [1, 1]} : vector<1x128xf32> to vector<1x96xf32>
    %89 = arith.negf %88 : vector<1x96xf32>
    %90 = math.exp %89 : vector<1x96xf32>
    %cst_25 = arith.constant 1.000000e+00 : f32
    %91 = vector.broadcast %cst_25 : f32 to vector<1x96xf32>
    %92 = arith.addf %91, %90 : vector<1x96xf32>
    %93 = arith.divf %91, %92 : vector<1x96xf32>
    %94 = vector.extract_strided_slice %93 {offsets = [0, 0], sizes = [1, 32], strides = [1, 1]} : vector<1x96xf32> to vector<1x32xf32>
    %95 = vector.extract_strided_slice %93 {offsets = [0, 32], sizes = [1, 32], strides = [1, 1]} : vector<1x96xf32> to vector<1x32xf32>
    %96 = vector.extract_strided_slice %93 {offsets = [0, 64], sizes = [1, 32], strides = [1, 1]} : vector<1x96xf32> to vector<1x32xf32>
    %97 = vector.extract_strided_slice %82 {offsets = [0, 96], sizes = [1, 32], strides = [1, 1]} : vector<1x128xf32> to vector<1x32xf32>
    %98 = math.tanh %97 : vector<1x32xf32>
    %99 = arith.mulf %95, %47 : vector<1x32xf32>
    %100 = arith.mulf %94, %98 : vector<1x32xf32>
    %101 = arith.addf %99, %100 : vector<1x32xf32>
    %102 = math.tanh %101 : vector<1x32xf32>
    %103 = arith.mulf %96, %102 : vector<1x32xf32>
    %104 = vector.extract_strided_slice %87 {offsets = [0, 0], sizes = [1, 96], strides = [1, 1]} : vector<1x128xf32> to vector<1x96xf32>
    %105 = arith.negf %104 : vector<1x96xf32>
    %106 = math.exp %105 : vector<1x96xf32>
    %cst_26 = arith.constant 1.000000e+00 : f32
    %107 = vector.broadcast %cst_26 : f32 to vector<1x96xf32>
    %108 = arith.addf %107, %106 : vector<1x96xf32>
    %109 = arith.divf %107, %108 : vector<1x96xf32>
    %110 = vector.extract_strided_slice %109 {offsets = [0, 0], sizes = [1, 32], strides = [1, 1]} : vector<1x96xf32> to vector<1x32xf32>
    %111 = vector.extract_strided_slice %109 {offsets = [0, 32], sizes = [1, 32], strides = [1, 1]} : vector<1x96xf32> to vector<1x32xf32>
    %112 = vector.extract_strided_slice %109 {offsets = [0, 64], sizes = [1, 32], strides = [1, 1]} : vector<1x96xf32> to vector<1x32xf32>
    %113 = vector.extract_strided_slice %87 {offsets = [0, 96], sizes = [1, 32], strides = [1, 1]} : vector<1x128xf32> to vector<1x32xf32>
    %114 = math.tanh %113 : vector<1x32xf32>
    %115 = arith.mulf %111, %63 : vector<1x32xf32>
    %116 = arith.mulf %110, %114 : vector<1x32xf32>
    %117 = arith.addf %115, %116 : vector<1x32xf32>
    %118 = math.tanh %117 : vector<1x32xf32>
    %119 = arith.mulf %112, %118 : vector<1x32xf32>
    %120 = arith.index_cast %10 : i32 to index
    %121 = arith.index_cast %c1_i32_20 : i32 to index
    %c0_27 = arith.constant 0 : index
    %122 = vector.load %arg6[%120, %121, %c0_27] : memref<2x8x128xf32, #tpu.memory_space<vmem>>, vector<1x1x32xf32>
    %123 = vector.shape_cast %122 : vector<1x1x32xf32> to vector<1x32xf32>
    %124 = vector.shape_cast %103 : vector<1x32xf32> to vector<1x1x32xf32>
    tpu.vector_store %arg6[%120, %121, %c0_27], %124 {strides = array<i32>} : memref<2x8x128xf32, #tpu.memory_space<vmem>>, vector<1x1x32xf32>,
    %c7_i32_28 = arith.constant 7 : i32
    %125 = arith.subi %c7_i32_28, %c1_i32_20 : i32
    %126 = arith.index_cast %10 : i32 to index
    %127 = arith.index_cast %125 : i32 to index
    %c32_29 = arith.constant 32 : index
    %128 = vector.load %arg6[%126, %127, %c32_29] : memref<2x8x128xf32, #tpu.memory_space<vmem>>, vector<1x1x32xf32>
    %129 = vector.shape_cast %128 : vector<1x1x32xf32> to vector<1x32xf32>
    %130 = vector.shape_cast %119 : vector<1x32xf32> to vector<1x1x32xf32>
    tpu.vector_store %arg6[%126, %127, %c32_29], %130 {strides = array<i32>} : memref<2x8x128xf32, #tpu.memory_space<vmem>>, vector<1x1x32xf32>,
    %131 = tpu.concatenate %103, %119 in 1 : vector<1x32xf32>, vector<1x32xf32> -> vector<1x64xf32>
    %c2_i32_30 = arith.constant 2 : i32
    %cst_31 = arith.constant dense<0.000000e+00> : vector<1x256xf32>
    %132 = tpu.matmul %131, %21, %cst_31 {dimension_numbers = #tpu.dot_dimension_numbers<[1], [0], [0], [1], [0, 0, 1, 1], [], []>} : vector<1x64xf32>, vector<64x256xf32>, vector<1x256xf32> -> vector<1x256xf32>
    %133 = arith.index_cast %c2_i32_30 : i32 to index
    %c0_32 = arith.constant 0 : index
    %134 = vector.load %arg7[%133, %c0_32] : memref<8x256xf32, #tpu.memory_space<vmem>>, vector<1x128xf32>
    %135 = vector.extract_strided_slice %132 {offsets = [0, 0], sizes = [1, 128], strides = [1, 1]} : vector<1x256xf32> to vector<1x128xf32>
    %136 = arith.addf %134, %135 : vector<1x128xf32>
    %c7_i32_33 = arith.constant 7 : i32
    %137 = arith.subi %c7_i32_33, %c2_i32_30 : i32
    %138 = arith.index_cast %137 : i32 to index
    %c128_34 = arith.constant 128 : index
    %139 = vector.load %arg7[%138, %c128_34] : memref<8x256xf32, #tpu.memory_space<vmem>>, vector<1x128xf32>
    %140 = vector.extract_strided_slice %132 {offsets = [0, 128], sizes = [1, 128], strides = [1, 1]} : vector<1x256xf32> to vector<1x128xf32>
    %141 = arith.addf %139, %140 : vector<1x128xf32>
    %142 = vector.extract_strided_slice %136 {offsets = [0, 0], sizes = [1, 96], strides = [1, 1]} : vector<1x128xf32> to vector<1x96xf32>
    %143 = arith.negf %142 : vector<1x96xf32>
    %144 = math.exp %143 : vector<1x96xf32>
    %cst_35 = arith.constant 1.000000e+00 : f32
    %145 = vector.broadcast %cst_35 : f32 to vector<1x96xf32>
    %146 = arith.addf %145, %144 : vector<1x96xf32>
    %147 = arith.divf %145, %146 : vector<1x96xf32>
    %148 = vector.extract_strided_slice %147 {offsets = [0, 0], sizes = [1, 32], strides = [1, 1]} : vector<1x96xf32> to vector<1x32xf32>
    %149 = vector.extract_strided_slice %147 {offsets = [0, 32], sizes = [1, 32], strides = [1, 1]} : vector<1x96xf32> to vector<1x32xf32>
    %150 = vector.extract_strided_slice %147 {offsets = [0, 64], sizes = [1, 32], strides = [1, 1]} : vector<1x96xf32> to vector<1x32xf32>
    %151 = vector.extract_strided_slice %136 {offsets = [0, 96], sizes = [1, 32], strides = [1, 1]} : vector<1x128xf32> to vector<1x32xf32>
    %152 = math.tanh %151 : vector<1x32xf32>
    %153 = arith.mulf %149, %101 : vector<1x32xf32>
    %154 = arith.mulf %148, %152 : vector<1x32xf32>
    %155 = arith.addf %153, %154 : vector<1x32xf32>
    %156 = math.tanh %155 : vector<1x32xf32>
    %157 = arith.mulf %150, %156 : vector<1x32xf32>
    %158 = vector.extract_strided_slice %141 {offsets = [0, 0], sizes = [1, 96], strides = [1, 1]} : vector<1x128xf32> to vector<1x96xf32>
    %159 = arith.negf %158 : vector<1x96xf32>
    %160 = math.exp %159 : vector<1x96xf32>
    %cst_36 = arith.constant 1.000000e+00 : f32
    %161 = vector.broadcast %cst_36 : f32 to vector<1x96xf32>
    %162 = arith.addf %161, %160 : vector<1x96xf32>
    %163 = arith.divf %161, %162 : vector<1x96xf32>
    %164 = vector.extract_strided_slice %163 {offsets = [0, 0], sizes = [1, 32], strides = [1, 1]} : vector<1x96xf32> to vector<1x32xf32>
    %165 = vector.extract_strided_slice %163 {offsets = [0, 32], sizes = [1, 32], strides = [1, 1]} : vector<1x96xf32> to vector<1x32xf32>
    %166 = vector.extract_strided_slice %163 {offsets = [0, 64], sizes = [1, 32], strides = [1, 1]} : vector<1x96xf32> to vector<1x32xf32>
    %167 = vector.extract_strided_slice %141 {offsets = [0, 96], sizes = [1, 32], strides = [1, 1]} : vector<1x128xf32> to vector<1x32xf32>
    %168 = math.tanh %167 : vector<1x32xf32>
    %169 = arith.mulf %165, %117 : vector<1x32xf32>
    %170 = arith.mulf %164, %168 : vector<1x32xf32>
    %171 = arith.addf %169, %170 : vector<1x32xf32>
    %172 = math.tanh %171 : vector<1x32xf32>
    %173 = arith.mulf %166, %172 : vector<1x32xf32>
    %174 = arith.index_cast %10 : i32 to index
    %175 = arith.index_cast %c2_i32_30 : i32 to index
    %c0_37 = arith.constant 0 : index
    %176 = vector.load %arg6[%174, %175, %c0_37] : memref<2x8x128xf32, #tpu.memory_space<vmem>>, vector<1x1x32xf32>
    %177 = vector.shape_cast %176 : vector<1x1x32xf32> to vector<1x32xf32>
    %178 = vector.shape_cast %157 : vector<1x32xf32> to vector<1x1x32xf32>
    tpu.vector_store %arg6[%174, %175, %c0_37], %178 {strides = array<i32>} : memref<2x8x128xf32, #tpu.memory_space<vmem>>, vector<1x1x32xf32>,
    %c7_i32_38 = arith.constant 7 : i32
    %179 = arith.subi %c7_i32_38, %c2_i32_30 : i32
    %180 = arith.index_cast %10 : i32 to index
    %181 = arith.index_cast %179 : i32 to index
    %c32_39 = arith.constant 32 : index
    %182 = vector.load %arg6[%180, %181, %c32_39] : memref<2x8x128xf32, #tpu.memory_space<vmem>>, vector<1x1x32xf32>
    %183 = vector.shape_cast %182 : vector<1x1x32xf32> to vector<1x32xf32>
    %184 = vector.shape_cast %173 : vector<1x32xf32> to vector<1x1x32xf32>
    tpu.vector_store %arg6[%180, %181, %c32_39], %184 {strides = array<i32>} : memref<2x8x128xf32, #tpu.memory_space<vmem>>, vector<1x1x32xf32>,
    %185 = tpu.concatenate %157, %173 in 1 : vector<1x32xf32>, vector<1x32xf32> -> vector<1x64xf32>
    %c3_i32 = arith.constant 3 : i32
    %cst_40 = arith.constant dense<0.000000e+00> : vector<1x256xf32>
    %186 = tpu.matmul %185, %21, %cst_40 {dimension_numbers = #tpu.dot_dimension_numbers<[1], [0], [0], [1], [0, 0, 1, 1], [], []>} : vector<1x64xf32>, vector<64x256xf32>, vector<1x256xf32> -> vector<1x256xf32>
    %187 = arith.index_cast %c3_i32 : i32 to index
    %c0_41 = arith.constant 0 : index
    %188 = vector.load %arg7[%187, %c0_41] : memref<8x256xf32, #tpu.memory_space<vmem>>, vector<1x128xf32>
    %189 = vector.extract_strided_slice %186 {offsets = [0, 0], sizes = [1, 128], strides = [1, 1]} : vector<1x256xf32> to vector<1x128xf32>
    %190 = arith.addf %188, %189 : vector<1x128xf32>
    %c7_i32_42 = arith.constant 7 : i32
    %191 = arith.subi %c7_i32_42, %c3_i32 : i32
    %192 = arith.index_cast %191 : i32 to index
    %c128_43 = arith.constant 128 : index
    %193 = vector.load %arg7[%192, %c128_43] : memref<8x256xf32, #tpu.memory_space<vmem>>, vector<1x128xf32>
    %194 = vector.extract_strided_slice %186 {offsets = [0, 128], sizes = [1, 128], strides = [1, 1]} : vector<1x256xf32> to vector<1x128xf32>
    %195 = arith.addf %193, %194 : vector<1x128xf32>
    %196 = vector.extract_strided_slice %190 {offsets = [0, 0], sizes = [1, 96], strides = [1, 1]} : vector<1x128xf32> to vector<1x96xf32>
    %197 = arith.negf %196 : vector<1x96xf32>
    %198 = math.exp %197 : vector<1x96xf32>
    %cst_44 = arith.constant 1.000000e+00 : f32
    %199 = vector.broadcast %cst_44 : f32 to vector<1x96xf32>
    %200 = arith.addf %199, %198 : vector<1x96xf32>
    %201 = arith.divf %199, %200 : vector<1x96xf32>
    %202 = vector.extract_strided_slice %201 {offsets = [0, 0], sizes = [1, 32], strides = [1, 1]} : vector<1x96xf32> to vector<1x32xf32>
    %203 = vector.extract_strided_slice %201 {offsets = [0, 32], sizes = [1, 32], strides = [1, 1]} : vector<1x96xf32> to vector<1x32xf32>
    %204 = vector.extract_strided_slice %201 {offsets = [0, 64], sizes = [1, 32], strides = [1, 1]} : vector<1x96xf32> to vector<1x32xf32>
    %205 = vector.extract_strided_slice %190 {offsets = [0, 96], sizes = [1, 32], strides = [1, 1]} : vector<1x128xf32> to vector<1x32xf32>
    %206 = math.tanh %205 : vector<1x32xf32>
    %207 = arith.mulf %203, %155 : vector<1x32xf32>
    %208 = arith.mulf %202, %206 : vector<1x32xf32>
    %209 = arith.addf %207, %208 : vector<1x32xf32>
    %210 = math.tanh %209 : vector<1x32xf32>
    %211 = arith.mulf %204, %210 : vector<1x32xf32>
    %212 = vector.extract_strided_slice %195 {offsets = [0, 0], sizes = [1, 96], strides = [1, 1]} : vector<1x128xf32> to vector<1x96xf32>
    %213 = arith.negf %212 : vector<1x96xf32>
    %214 = math.exp %213 : vector<1x96xf32>
    %cst_45 = arith.constant 1.000000e+00 : f32
    %215 = vector.broadcast %cst_45 : f32 to vector<1x96xf32>
    %216 = arith.addf %215, %214 : vector<1x96xf32>
    %217 = arith.divf %215, %216 : vector<1x96xf32>
    %218 = vector.extract_strided_slice %217 {offsets = [0, 0], sizes = [1, 32], strides = [1, 1]} : vector<1x96xf32> to vector<1x32xf32>
    %219 = vector.extract_strided_slice %217 {offsets = [0, 32], sizes = [1, 32], strides = [1, 1]} : vector<1x96xf32> to vector<1x32xf32>
    %220 = vector.extract_strided_slice %217 {offsets = [0, 64], sizes = [1, 32], strides = [1, 1]} : vector<1x96xf32> to vector<1x32xf32>
    %221 = vector.extract_strided_slice %195 {offsets = [0, 96], sizes = [1, 32], strides = [1, 1]} : vector<1x128xf32> to vector<1x32xf32>
    %222 = math.tanh %221 : vector<1x32xf32>
    %223 = arith.mulf %219, %171 : vector<1x32xf32>
    %224 = arith.mulf %218, %222 : vector<1x32xf32>
    %225 = arith.addf %223, %224 : vector<1x32xf32>
    %226 = math.tanh %225 : vector<1x32xf32>
    %227 = arith.mulf %220, %226 : vector<1x32xf32>
    %228 = arith.index_cast %10 : i32 to index
    %229 = arith.index_cast %c3_i32 : i32 to index
    %c0_46 = arith.constant 0 : index
    %230 = vector.load %arg6[%228, %229, %c0_46] : memref<2x8x128xf32, #tpu.memory_space<vmem>>, vector<1x1x32xf32>
    %231 = vector.shape_cast %230 : vector<1x1x32xf32> to vector<1x32xf32>
    %232 = vector.shape_cast %211 : vector<1x32xf32> to vector<1x1x32xf32>
    tpu.vector_store %arg6[%228, %229, %c0_46], %232 {strides = array<i32>} : memref<2x8x128xf32, #tpu.memory_space<vmem>>, vector<1x1x32xf32>,
    %c7_i32_47 = arith.constant 7 : i32
    %233 = arith.subi %c7_i32_47, %c3_i32 : i32
    %234 = arith.index_cast %10 : i32 to index
    %235 = arith.index_cast %233 : i32 to index
    %c32_48 = arith.constant 32 : index
    %236 = vector.load %arg6[%234, %235, %c32_48] : memref<2x8x128xf32, #tpu.memory_space<vmem>>, vector<1x1x32xf32>
    %237 = vector.shape_cast %236 : vector<1x1x32xf32> to vector<1x32xf32>
    %238 = vector.shape_cast %227 : vector<1x32xf32> to vector<1x1x32xf32>
    tpu.vector_store %arg6[%234, %235, %c32_48], %238 {strides = array<i32>} : memref<2x8x128xf32, #tpu.memory_space<vmem>>, vector<1x1x32xf32>,
    %239 = tpu.concatenate %211, %227 in 1 : vector<1x32xf32>, vector<1x32xf32> -> vector<1x64xf32>
    %c4_i32 = arith.constant 4 : i32
    %cst_49 = arith.constant dense<0.000000e+00> : vector<1x256xf32>
    %240 = tpu.matmul %239, %21, %cst_49 {dimension_numbers = #tpu.dot_dimension_numbers<[1], [0], [0], [1], [0, 0, 1, 1], [], []>} : vector<1x64xf32>, vector<64x256xf32>, vector<1x256xf32> -> vector<1x256xf32>
    %241 = arith.index_cast %c4_i32 : i32 to index
    %c0_50 = arith.constant 0 : index
    %242 = vector.load %arg7[%241, %c0_50] : memref<8x256xf32, #tpu.memory_space<vmem>>, vector<1x128xf32>
    %243 = vector.extract_strided_slice %240 {offsets = [0, 0], sizes = [1, 128], strides = [1, 1]} : vector<1x256xf32> to vector<1x128xf32>
    %244 = arith.addf %242, %243 : vector<1x128xf32>
    %c7_i32_51 = arith.constant 7 : i32
    %245 = arith.subi %c7_i32_51, %c4_i32 : i32
    %246 = arith.index_cast %245 : i32 to index
    %c128_52 = arith.constant 128 : index
    %247 = vector.load %arg7[%246, %c128_52] : memref<8x256xf32, #tpu.memory_space<vmem>>, vector<1x128xf32>
    %248 = vector.extract_strided_slice %240 {offsets = [0, 128], sizes = [1, 128], strides = [1, 1]} : vector<1x256xf32> to vector<1x128xf32>
    %249 = arith.addf %247, %248 : vector<1x128xf32>
    %250 = vector.extract_strided_slice %244 {offsets = [0, 0], sizes = [1, 96], strides = [1, 1]} : vector<1x128xf32> to vector<1x96xf32>
    %251 = arith.negf %250 : vector<1x96xf32>
    %252 = math.exp %251 : vector<1x96xf32>
    %cst_53 = arith.constant 1.000000e+00 : f32
    %253 = vector.broadcast %cst_53 : f32 to vector<1x96xf32>
    %254 = arith.addf %253, %252 : vector<1x96xf32>
    %255 = arith.divf %253, %254 : vector<1x96xf32>
    %256 = vector.extract_strided_slice %255 {offsets = [0, 0], sizes = [1, 32], strides = [1, 1]} : vector<1x96xf32> to vector<1x32xf32>
    %257 = vector.extract_strided_slice %255 {offsets = [0, 32], sizes = [1, 32], strides = [1, 1]} : vector<1x96xf32> to vector<1x32xf32>
    %258 = vector.extract_strided_slice %255 {offsets = [0, 64], sizes = [1, 32], strides = [1, 1]} : vector<1x96xf32> to vector<1x32xf32>
    %259 = vector.extract_strided_slice %244 {offsets = [0, 96], sizes = [1, 32], strides = [1, 1]} : vector<1x128xf32> to vector<1x32xf32>
    %260 = math.tanh %259 : vector<1x32xf32>
    %261 = arith.mulf %257, %209 : vector<1x32xf32>
    %262 = arith.mulf %256, %260 : vector<1x32xf32>
    %263 = arith.addf %261, %262 : vector<1x32xf32>
    %264 = math.tanh %263 : vector<1x32xf32>
    %265 = arith.mulf %258, %264 : vector<1x32xf32>
    %266 = vector.extract_strided_slice %249 {offsets = [0, 0], sizes = [1, 96], strides = [1, 1]} : vector<1x128xf32> to vector<1x96xf32>
    %267 = arith.negf %266 : vector<1x96xf32>
    %268 = math.exp %267 : vector<1x96xf32>
    %cst_54 = arith.constant 1.000000e+00 : f32
    %269 = vector.broadcast %cst_54 : f32 to vector<1x96xf32>
    %270 = arith.addf %269, %268 : vector<1x96xf32>
    %271 = arith.divf %269, %270 : vector<1x96xf32>
    %272 = vector.extract_strided_slice %271 {offsets = [0, 0], sizes = [1, 32], strides = [1, 1]} : vector<1x96xf32> to vector<1x32xf32>
    %273 = vector.extract_strided_slice %271 {offsets = [0, 32], sizes = [1, 32], strides = [1, 1]} : vector<1x96xf32> to vector<1x32xf32>
    %274 = vector.extract_strided_slice %271 {offsets = [0, 64], sizes = [1, 32], strides = [1, 1]} : vector<1x96xf32> to vector<1x32xf32>
    %275 = vector.extract_strided_slice %249 {offsets = [0, 96], sizes = [1, 32], strides = [1, 1]} : vector<1x128xf32> to vector<1x32xf32>
    %276 = math.tanh %275 : vector<1x32xf32>
    %277 = arith.mulf %273, %225 : vector<1x32xf32>
    %278 = arith.mulf %272, %276 : vector<1x32xf32>
    %279 = arith.addf %277, %278 : vector<1x32xf32>
    %280 = math.tanh %279 : vector<1x32xf32>
    %281 = arith.mulf %274, %280 : vector<1x32xf32>
    %282 = arith.index_cast %10 : i32 to index
    %283 = arith.index_cast %c4_i32 : i32 to index
    %c0_55 = arith.constant 0 : index
    %284 = vector.load %arg6[%282, %283, %c0_55] : memref<2x8x128xf32, #tpu.memory_space<vmem>>, vector<1x1x32xf32>
    %285 = vector.shape_cast %284 : vector<1x1x32xf32> to vector<1x32xf32>
    %286 = vector.shape_cast %265 : vector<1x32xf32> to vector<1x1x32xf32>
    tpu.vector_store %arg6[%282, %283, %c0_55], %286 {strides = array<i32>} : memref<2x8x128xf32, #tpu.memory_space<vmem>>, vector<1x1x32xf32>,
    %c7_i32_56 = arith.constant 7 : i32
    %287 = arith.subi %c7_i32_56, %c4_i32 : i32
    %288 = arith.index_cast %10 : i32 to index
    %289 = arith.index_cast %287 : i32 to index
    %c32_57 = arith.constant 32 : index
    %290 = vector.load %arg6[%288, %289, %c32_57] : memref<2x8x128xf32, #tpu.memory_space<vmem>>, vector<1x1x32xf32>
    %291 = vector.shape_cast %290 : vector<1x1x32xf32> to vector<1x32xf32>
    %292 = vector.shape_cast %281 : vector<1x32xf32> to vector<1x1x32xf32>
    tpu.vector_store %arg6[%288, %289, %c32_57], %292 {strides = array<i32>} : memref<2x8x128xf32, #tpu.memory_space<vmem>>, vector<1x1x32xf32>,
    %293 = tpu.concatenate %265, %281 in 1 : vector<1x32xf32>, vector<1x32xf32> -> vector<1x64xf32>
    %c5_i32 = arith.constant 5 : i32
    %cst_58 = arith.constant dense<0.000000e+00> : vector<1x256xf32>
    %294 = tpu.matmul %293, %21, %cst_58 {dimension_numbers = #tpu.dot_dimension_numbers<[1], [0], [0], [1], [0, 0, 1, 1], [], []>} : vector<1x64xf32>, vector<64x256xf32>, vector<1x256xf32> -> vector<1x256xf32>
    %295 = arith.index_cast %c5_i32 : i32 to index
    %c0_59 = arith.constant 0 : index
    %296 = vector.load %arg7[%295, %c0_59] : memref<8x256xf32, #tpu.memory_space<vmem>>, vector<1x128xf32>
    %297 = vector.extract_strided_slice %294 {offsets = [0, 0], sizes = [1, 128], strides = [1, 1]} : vector<1x256xf32> to vector<1x128xf32>
    %298 = arith.addf %296, %297 : vector<1x128xf32>
    %c7_i32_60 = arith.constant 7 : i32
    %299 = arith.subi %c7_i32_60, %c5_i32 : i32
    %300 = arith.index_cast %299 : i32 to index
    %c128_61 = arith.constant 128 : index
    %301 = vector.load %arg7[%300, %c128_61] : memref<8x256xf32, #tpu.memory_space<vmem>>, vector<1x128xf32>
    %302 = vector.extract_strided_slice %294 {offsets = [0, 128], sizes = [1, 128], strides = [1, 1]} : vector<1x256xf32> to vector<1x128xf32>
    %303 = arith.addf %301, %302 : vector<1x128xf32>
    %304 = vector.extract_strided_slice %298 {offsets = [0, 0], sizes = [1, 96], strides = [1, 1]} : vector<1x128xf32> to vector<1x96xf32>
    %305 = arith.negf %304 : vector<1x96xf32>
    %306 = math.exp %305 : vector<1x96xf32>
    %cst_62 = arith.constant 1.000000e+00 : f32
    %307 = vector.broadcast %cst_62 : f32 to vector<1x96xf32>
    %308 = arith.addf %307, %306 : vector<1x96xf32>
    %309 = arith.divf %307, %308 : vector<1x96xf32>
    %310 = vector.extract_strided_slice %309 {offsets = [0, 0], sizes = [1, 32], strides = [1, 1]} : vector<1x96xf32> to vector<1x32xf32>
    %311 = vector.extract_strided_slice %309 {offsets = [0, 32], sizes = [1, 32], strides = [1, 1]} : vector<1x96xf32> to vector<1x32xf32>
    %312 = vector.extract_strided_slice %309 {offsets = [0, 64], sizes = [1, 32], strides = [1, 1]} : vector<1x96xf32> to vector<1x32xf32>
    %313 = vector.extract_strided_slice %298 {offsets = [0, 96], sizes = [1, 32], strides = [1, 1]} : vector<1x128xf32> to vector<1x32xf32>
    %314 = math.tanh %313 : vector<1x32xf32>
    %315 = arith.mulf %311, %263 : vector<1x32xf32>
    %316 = arith.mulf %310, %314 : vector<1x32xf32>
    %317 = arith.addf %315, %316 : vector<1x32xf32>
    %318 = math.tanh %317 : vector<1x32xf32>
    %319 = arith.mulf %312, %318 : vector<1x32xf32>
    %320 = vector.extract_strided_slice %303 {offsets = [0, 0], sizes = [1, 96], strides = [1, 1]} : vector<1x128xf32> to vector<1x96xf32>
    %321 = arith.negf %320 : vector<1x96xf32>
    %322 = math.exp %321 : vector<1x96xf32>
    %cst_63 = arith.constant 1.000000e+00 : f32
    %323 = vector.broadcast %cst_63 : f32 to vector<1x96xf32>
    %324 = arith.addf %323, %322 : vector<1x96xf32>
    %325 = arith.divf %323, %324 : vector<1x96xf32>
    %326 = vector.extract_strided_slice %325 {offsets = [0, 0], sizes = [1, 32], strides = [1, 1]} : vector<1x96xf32> to vector<1x32xf32>
    %327 = vector.extract_strided_slice %325 {offsets = [0, 32], sizes = [1, 32], strides = [1, 1]} : vector<1x96xf32> to vector<1x32xf32>
    %328 = vector.extract_strided_slice %325 {offsets = [0, 64], sizes = [1, 32], strides = [1, 1]} : vector<1x96xf32> to vector<1x32xf32>
    %329 = vector.extract_strided_slice %303 {offsets = [0, 96], sizes = [1, 32], strides = [1, 1]} : vector<1x128xf32> to vector<1x32xf32>
    %330 = math.tanh %329 : vector<1x32xf32>
    %331 = arith.mulf %327, %279 : vector<1x32xf32>
    %332 = arith.mulf %326, %330 : vector<1x32xf32>
    %333 = arith.addf %331, %332 : vector<1x32xf32>
    %334 = math.tanh %333 : vector<1x32xf32>
    %335 = arith.mulf %328, %334 : vector<1x32xf32>
    %336 = arith.index_cast %10 : i32 to index
    %337 = arith.index_cast %c5_i32 : i32 to index
    %c0_64 = arith.constant 0 : index
    %338 = vector.load %arg6[%336, %337, %c0_64] : memref<2x8x128xf32, #tpu.memory_space<vmem>>, vector<1x1x32xf32>
    %339 = vector.shape_cast %338 : vector<1x1x32xf32> to vector<1x32xf32>
    %340 = vector.shape_cast %319 : vector<1x32xf32> to vector<1x1x32xf32>
    tpu.vector_store %arg6[%336, %337, %c0_64], %340 {strides = array<i32>} : memref<2x8x128xf32, #tpu.memory_space<vmem>>, vector<1x1x32xf32>,
    %c7_i32_65 = arith.constant 7 : i32
    %341 = arith.subi %c7_i32_65, %c5_i32 : i32
    %342 = arith.index_cast %10 : i32 to index
    %343 = arith.index_cast %341 : i32 to index
    %c32_66 = arith.constant 32 : index
    %344 = vector.load %arg6[%342, %343, %c32_66] : memref<2x8x128xf32, #tpu.memory_space<vmem>>, vector<1x1x32xf32>
    %345 = vector.shape_cast %344 : vector<1x1x32xf32> to vector<1x32xf32>
    %346 = vector.shape_cast %335 : vector<1x32xf32> to vector<1x1x32xf32>
    tpu.vector_store %arg6[%342, %343, %c32_66], %346 {strides = array<i32>} : memref<2x8x128xf32, #tpu.memory_space<vmem>>, vector<1x1x32xf32>,
    %347 = tpu.concatenate %319, %335 in 1 : vector<1x32xf32>, vector<1x32xf32> -> vector<1x64xf32>
    %c6_i32 = arith.constant 6 : i32
    %cst_67 = arith.constant dense<0.000000e+00> : vector<1x256xf32>
    %348 = tpu.matmul %347, %21, %cst_67 {dimension_numbers = #tpu.dot_dimension_numbers<[1], [0], [0], [1], [0, 0, 1, 1], [], []>} : vector<1x64xf32>, vector<64x256xf32>, vector<1x256xf32> -> vector<1x256xf32>
    %349 = arith.index_cast %c6_i32 : i32 to index
    %c0_68 = arith.constant 0 : index
    %350 = vector.load %arg7[%349, %c0_68] : memref<8x256xf32, #tpu.memory_space<vmem>>, vector<1x128xf32>
    %351 = vector.extract_strided_slice %348 {offsets = [0, 0], sizes = [1, 128], strides = [1, 1]} : vector<1x256xf32> to vector<1x128xf32>
    %352 = arith.addf %350, %351 : vector<1x128xf32>
    %c7_i32_69 = arith.constant 7 : i32
    %353 = arith.subi %c7_i32_69, %c6_i32 : i32
    %354 = arith.index_cast %353 : i32 to index
    %c128_70 = arith.constant 128 : index
    %355 = vector.load %arg7[%354, %c128_70] : memref<8x256xf32, #tpu.memory_space<vmem>>, vector<1x128xf32>
    %356 = vector.extract_strided_slice %348 {offsets = [0, 128], sizes = [1, 128], strides = [1, 1]} : vector<1x256xf32> to vector<1x128xf32>
    %357 = arith.addf %355, %356 : vector<1x128xf32>
    %358 = vector.extract_strided_slice %352 {offsets = [0, 0], sizes = [1, 96], strides = [1, 1]} : vector<1x128xf32> to vector<1x96xf32>
    %359 = arith.negf %358 : vector<1x96xf32>
    %360 = math.exp %359 : vector<1x96xf32>
    %cst_71 = arith.constant 1.000000e+00 : f32
    %361 = vector.broadcast %cst_71 : f32 to vector<1x96xf32>
    %362 = arith.addf %361, %360 : vector<1x96xf32>
    %363 = arith.divf %361, %362 : vector<1x96xf32>
    %364 = vector.extract_strided_slice %363 {offsets = [0, 0], sizes = [1, 32], strides = [1, 1]} : vector<1x96xf32> to vector<1x32xf32>
    %365 = vector.extract_strided_slice %363 {offsets = [0, 32], sizes = [1, 32], strides = [1, 1]} : vector<1x96xf32> to vector<1x32xf32>
    %366 = vector.extract_strided_slice %363 {offsets = [0, 64], sizes = [1, 32], strides = [1, 1]} : vector<1x96xf32> to vector<1x32xf32>
    %367 = vector.extract_strided_slice %352 {offsets = [0, 96], sizes = [1, 32], strides = [1, 1]} : vector<1x128xf32> to vector<1x32xf32>
    %368 = math.tanh %367 : vector<1x32xf32>
    %369 = arith.mulf %365, %317 : vector<1x32xf32>
    %370 = arith.mulf %364, %368 : vector<1x32xf32>
    %371 = arith.addf %369, %370 : vector<1x32xf32>
    %372 = math.tanh %371 : vector<1x32xf32>
    %373 = arith.mulf %366, %372 : vector<1x32xf32>
    %374 = vector.extract_strided_slice %357 {offsets = [0, 0], sizes = [1, 96], strides = [1, 1]} : vector<1x128xf32> to vector<1x96xf32>
    %375 = arith.negf %374 : vector<1x96xf32>
    %376 = math.exp %375 : vector<1x96xf32>
    %cst_72 = arith.constant 1.000000e+00 : f32
    %377 = vector.broadcast %cst_72 : f32 to vector<1x96xf32>
    %378 = arith.addf %377, %376 : vector<1x96xf32>
    %379 = arith.divf %377, %378 : vector<1x96xf32>
    %380 = vector.extract_strided_slice %379 {offsets = [0, 0], sizes = [1, 32], strides = [1, 1]} : vector<1x96xf32> to vector<1x32xf32>
    %381 = vector.extract_strided_slice %379 {offsets = [0, 32], sizes = [1, 32], strides = [1, 1]} : vector<1x96xf32> to vector<1x32xf32>
    %382 = vector.extract_strided_slice %379 {offsets = [0, 64], sizes = [1, 32], strides = [1, 1]} : vector<1x96xf32> to vector<1x32xf32>
    %383 = vector.extract_strided_slice %357 {offsets = [0, 96], sizes = [1, 32], strides = [1, 1]} : vector<1x128xf32> to vector<1x32xf32>
    %384 = math.tanh %383 : vector<1x32xf32>
    %385 = arith.mulf %381, %333 : vector<1x32xf32>
    %386 = arith.mulf %380, %384 : vector<1x32xf32>
    %387 = arith.addf %385, %386 : vector<1x32xf32>
    %388 = math.tanh %387 : vector<1x32xf32>
    %389 = arith.mulf %382, %388 : vector<1x32xf32>
    %390 = arith.index_cast %10 : i32 to index
    %391 = arith.index_cast %c6_i32 : i32 to index
    %c0_73 = arith.constant 0 : index
    %392 = vector.load %arg6[%390, %391, %c0_73] : memref<2x8x128xf32, #tpu.memory_space<vmem>>, vector<1x1x32xf32>
    %393 = vector.shape_cast %392 : vector<1x1x32xf32> to vector<1x32xf32>
    %394 = vector.shape_cast %373 : vector<1x32xf32> to vector<1x1x32xf32>
    tpu.vector_store %arg6[%390, %391, %c0_73], %394 {strides = array<i32>} : memref<2x8x128xf32, #tpu.memory_space<vmem>>, vector<1x1x32xf32>,
    %c7_i32_74 = arith.constant 7 : i32
    %395 = arith.subi %c7_i32_74, %c6_i32 : i32
    %396 = arith.index_cast %10 : i32 to index
    %397 = arith.index_cast %395 : i32 to index
    %c32_75 = arith.constant 32 : index
    %398 = vector.load %arg6[%396, %397, %c32_75] : memref<2x8x128xf32, #tpu.memory_space<vmem>>, vector<1x1x32xf32>
    %399 = vector.shape_cast %398 : vector<1x1x32xf32> to vector<1x32xf32>
    %400 = vector.shape_cast %389 : vector<1x32xf32> to vector<1x1x32xf32>
    tpu.vector_store %arg6[%396, %397, %c32_75], %400 {strides = array<i32>} : memref<2x8x128xf32, #tpu.memory_space<vmem>>, vector<1x1x32xf32>,
    %401 = tpu.concatenate %373, %389 in 1 : vector<1x32xf32>, vector<1x32xf32> -> vector<1x64xf32>
    %c7_i32_76 = arith.constant 7 : i32
    %cst_77 = arith.constant dense<0.000000e+00> : vector<1x256xf32>
    %402 = tpu.matmul %401, %21, %cst_77 {dimension_numbers = #tpu.dot_dimension_numbers<[1], [0], [0], [1], [0, 0, 1, 1], [], []>} : vector<1x64xf32>, vector<64x256xf32>, vector<1x256xf32> -> vector<1x256xf32>
    %403 = arith.index_cast %c7_i32_76 : i32 to index
    %c0_78 = arith.constant 0 : index
    %404 = vector.load %arg7[%403, %c0_78] : memref<8x256xf32, #tpu.memory_space<vmem>>, vector<1x128xf32>
    %405 = vector.extract_strided_slice %402 {offsets = [0, 0], sizes = [1, 128], strides = [1, 1]} : vector<1x256xf32> to vector<1x128xf32>
    %406 = arith.addf %404, %405 : vector<1x128xf32>
    %c7_i32_79 = arith.constant 7 : i32
    %407 = arith.subi %c7_i32_79, %c7_i32_76 : i32
    %408 = arith.index_cast %407 : i32 to index
    %c128_80 = arith.constant 128 : index
    %409 = vector.load %arg7[%408, %c128_80] : memref<8x256xf32, #tpu.memory_space<vmem>>, vector<1x128xf32>
    %410 = vector.extract_strided_slice %402 {offsets = [0, 128], sizes = [1, 128], strides = [1, 1]} : vector<1x256xf32> to vector<1x128xf32>
    %411 = arith.addf %409, %410 : vector<1x128xf32>
    %412 = vector.extract_strided_slice %406 {offsets = [0, 0], sizes = [1, 96], strides = [1, 1]} : vector<1x128xf32> to vector<1x96xf32>
    %413 = arith.negf %412 : vector<1x96xf32>
    %414 = math.exp %413 : vector<1x96xf32>
    %cst_81 = arith.constant 1.000000e+00 : f32
    %415 = vector.broadcast %cst_81 : f32 to vector<1x96xf32>
    %416 = arith.addf %415, %414 : vector<1x96xf32>
    %417 = arith.divf %415, %416 : vector<1x96xf32>
    %418 = vector.extract_strided_slice %417 {offsets = [0, 0], sizes = [1, 32], strides = [1, 1]} : vector<1x96xf32> to vector<1x32xf32>
    %419 = vector.extract_strided_slice %417 {offsets = [0, 32], sizes = [1, 32], strides = [1, 1]} : vector<1x96xf32> to vector<1x32xf32>
    %420 = vector.extract_strided_slice %417 {offsets = [0, 64], sizes = [1, 32], strides = [1, 1]} : vector<1x96xf32> to vector<1x32xf32>
    %421 = vector.extract_strided_slice %406 {offsets = [0, 96], sizes = [1, 32], strides = [1, 1]} : vector<1x128xf32> to vector<1x32xf32>
    %422 = math.tanh %421 : vector<1x32xf32>
    %423 = arith.mulf %419, %371 : vector<1x32xf32>
    %424 = arith.mulf %418, %422 : vector<1x32xf32>
    %425 = arith.addf %423, %424 : vector<1x32xf32>
    %426 = math.tanh %425 : vector<1x32xf32>
    %427 = arith.mulf %420, %426 : vector<1x32xf32>
    %428 = vector.extract_strided_slice %411 {offsets = [0, 0], sizes = [1, 96], strides = [1, 1]} : vector<1x128xf32> to vector<1x96xf32>
    %429 = arith.negf %428 : vector<1x96xf32>
    %430 = math.exp %429 : vector<1x96xf32>
    %cst_82 = arith.constant 1.000000e+00 : f32
    %431 = vector.broadcast %cst_82 : f32 to vector<1x96xf32>
    %432 = arith.addf %431, %430 : vector<1x96xf32>
    %433 = arith.divf %431, %432 : vector<1x96xf32>
    %434 = vector.extract_strided_slice %433 {offsets = [0, 0], sizes = [1, 32], strides = [1, 1]} : vector<1x96xf32> to vector<1x32xf32>
    %435 = vector.extract_strided_slice %433 {offsets = [0, 32], sizes = [1, 32], strides = [1, 1]} : vector<1x96xf32> to vector<1x32xf32>
    %436 = vector.extract_strided_slice %433 {offsets = [0, 64], sizes = [1, 32], strides = [1, 1]} : vector<1x96xf32> to vector<1x32xf32>
    %437 = vector.extract_strided_slice %411 {offsets = [0, 96], sizes = [1, 32], strides = [1, 1]} : vector<1x128xf32> to vector<1x32xf32>
    %438 = math.tanh %437 : vector<1x32xf32>
    %439 = arith.mulf %435, %387 : vector<1x32xf32>
    %440 = arith.mulf %434, %438 : vector<1x32xf32>
    %441 = arith.addf %439, %440 : vector<1x32xf32>
    %442 = math.tanh %441 : vector<1x32xf32>
    %443 = arith.mulf %436, %442 : vector<1x32xf32>
    %444 = arith.index_cast %10 : i32 to index
    %445 = arith.index_cast %c7_i32_76 : i32 to index
    %c0_83 = arith.constant 0 : index
    %446 = vector.load %arg6[%444, %445, %c0_83] : memref<2x8x128xf32, #tpu.memory_space<vmem>>, vector<1x1x32xf32>
    %447 = vector.shape_cast %446 : vector<1x1x32xf32> to vector<1x32xf32>
    %448 = vector.shape_cast %427 : vector<1x32xf32> to vector<1x1x32xf32>
    tpu.vector_store %arg6[%444, %445, %c0_83], %448 {strides = array<i32>} : memref<2x8x128xf32, #tpu.memory_space<vmem>>, vector<1x1x32xf32>,
    %c7_i32_84 = arith.constant 7 : i32
    %449 = arith.subi %c7_i32_84, %c7_i32_76 : i32
    %450 = arith.index_cast %10 : i32 to index
    %451 = arith.index_cast %449 : i32 to index
    %c32_85 = arith.constant 32 : index
    %452 = vector.load %arg6[%450, %451, %c32_85] : memref<2x8x128xf32, #tpu.memory_space<vmem>>, vector<1x1x32xf32>
    %453 = vector.shape_cast %452 : vector<1x1x32xf32> to vector<1x32xf32>
    %454 = vector.shape_cast %443 : vector<1x32xf32> to vector<1x1x32xf32>
    tpu.vector_store %arg6[%450, %451, %c32_85], %454 {strides = array<i32>} : memref<2x8x128xf32, #tpu.memory_space<vmem>>, vector<1x1x32xf32>,
    %455 = tpu.concatenate %427, %443 in 1 : vector<1x32xf32>, vector<1x32xf32> -> vector<1x64xf32>
    %c8_i32 = arith.constant 8 : i32
    %c1_i32_86 = arith.constant 1 : i32
    %456 = arith.cmpi eq, %arg0, %c1_i32_86 : i32
    %457 = arith.extui %456 : i1 to i32
    %c0_i32_87 = arith.constant 0 : i32
    %458 = arith.cmpi ne, %457, %c0_i32_87 : i32
    scf.if %458 {
      %459 = arith.index_cast %10 : i32 to index
      %c0_88 = arith.constant 0 : index
      %c0_89 = arith.constant 0 : index
      %460 = vector.load %arg6[%459, %c0_88, %c0_89] : memref<2x8x128xf32, #tpu.memory_space<vmem>>, vector<1x8x128xf32>
      %461 = vector.shape_cast %460 : vector<1x8x128xf32> to vector<8x128xf32>
      %c0_90 = arith.constant 0 : index
      %c0_91 = arith.constant 0 : index
      %462 = vector.load %arg5[%c0_90, %c0_91] : memref<8x128xf32, #tpu.memory_space<vmem>>, vector<8x128xf32>
      tpu.vector_store %arg5[%c0_90, %c0_91], %461 {strides = array<i32>} : memref<8x128xf32, #tpu.memory_space<vmem>>, vector<8x128xf32>,
    } else {
    }
    return
  }
  func.func @transform_0(%arg0: i32) -> (i32, i32) {
    %c0_i32 = arith.constant 0 : i32
    %c0_i32_0 = arith.constant 0 : i32
    %c0_i32_1 = arith.constant 0 : i32
    return %c0_i32, %c0_i32_0 : i32, i32
  }
  func.func @transform_1(%arg0: i32) -> (i32, i32, i32) {
    %c0_i32 = arith.constant 0 : i32
    %c0_i32_0 = arith.constant 0 : i32
    %c0_i32_1 = arith.constant 0 : i32
    return %arg0, %c0_i32, %c0_i32_0 : i32, i32, i32
  }
  func.func @transform_2(%arg0: i32) -> (i32, i32, i32) {
    %c0_i32 = arith.constant 0 : i32
    %c0_i32_0 = arith.constant 0 : i32
    %c0_i32_1 = arith.constant 0 : i32
    return %arg0, %c0_i32, %c0_i32_0 : i32, i32, i32
  }
  func.func @transform_3(%arg0: i32) -> (i32, i32, i32) {
    %c0_i32 = arith.constant 0 : i32
    %c0_i32_0 = arith.constant 0 : i32
    %c0_i32_1 = arith.constant 0 : i32
    return %arg0, %c0_i32, %c0_i32_0 : i32, i32, i32
  }
  func.func @transform_4(%arg0: i32) -> (i32, i32) {
    %c0_i32 = arith.constant 0 : i32
    %c0_i32_0 = arith.constant 0 : i32
    %c0_i32_1 = arith.constant 0 : i32
    return %c0_i32, %c0_i32_0 : i32, i32
  }
}

</mosaic_0001>

<llo_original>
// kernel: encoder_bilstm_forward.1
$region0: #{encoder_bilstm_forward.1}
  #allocation0 [shape = 'u32[]', space=smem, size = 0x4, offset = 0x4, fixed_abs, tag = 'smem constant byte address 0x4 - core index']
  #allocation1 [shape = 'u32[144,128]{1,0:T(1,128)}', space=vmem, size = 0x12000, scoped, tag = 'internal scratch']
  #allocation2 [shape = 'f32[2,8,128]{2,1,0:T(8,128)}', space=vmem, size = 0x2000, scoped, tag = 'scratch operand']
  #allocation3 [shape = 'f32[8,256]{1,0:T(8,128)}', space=vmem, size = 0x2000, scoped, tag = 'scratch operand']
  %s0 = inlined_call_operand.vmem [shape: f32[8,128], index: 0, kind: input, shape index: {}]
  %s1 = inlined_call_operand.hbm [shape: f32[2,128,256], index: 1, kind: input, shape index: {}]
  %s2 = inlined_call_operand.hbm [shape: f32[2,64,256], index: 2, kind: input, shape index: {}]
  %s3 = inlined_call_operand.vmem [shape: f32[2,1,256], index: 3, kind: input, shape index: {}]
  %s4 = inlined_call_operand.hbm [shape: f32[8,128], index: 4, kind: output, shape index: {}]
  %s5 = sld [smem:[#allocation0]]
  $region69: #{encoder_bilstm_forward.1} parent=0
    _
  %s7 = ssub.s32 1, %s5
  %s8 = scalar_select 0, %s7, %s5
  $region1: #{encoder_bilstm_forward.1} parent=0
    #allocation4 [shape = 'u8[262144]{0}', space=vmem, size = 0x40000, scoped, tag = 'input window, operand 1']
    #allocation5 [shape = 's32[2]{0}', space=sflag, size = 0x8, scoped, tag = 'scoped memory for encoder_bilstm_forward.1']
    #allocation6 [shape = 's32[2]{0}', space=sflag, size = 0x8, scoped, tag = 'scoped memory for encoder_bilstm_forward.1']
    #allocation7 [shape = 'u8[131072]{0}', space=vmem, size = 0x20000, scoped, tag = 'input window, operand 2']
    #allocation8 [shape = 's32[2]{0}', space=sflag, size = 0x8, scoped, tag = 'scoped memory for encoder_bilstm_forward.1']
    #allocation9 [shape = 'u8[4096]{0}', space=vmem, size = 0x1000, scoped, tag = 'output window, operand 0, single buffered']
    %9 = vsyncpa [#allocation5], 0
    %s10 = scalar_lea.sflag [#allocation5], 1
    %11 = vsyncpa %s10, 0
    %12 = vsyncpa [#allocation8], 0
    %s13 = scalar_lea.sflag [#allocation8], 1
    %14 = vsyncpa %s13, 0
    %15 = vsyncpa [#allocation6], 0
    loop: start=0, step=1, limit=4
    $region2: #{encoder_bilstm_forward.1} parent=1 // loop_pre_header
      _
    $region3: #{encoder_bilstm_forward.1} parent=1 // loop_header
      %s17 = sphi 0, %s21
      %p18 = scmp.ge.s32.totalorder %s17, 4
      %s25 = sphi 0, %s25
      %s27 = sphi 0, %s25
      %s28 = sphi 0, %s27
      %s42 = sphi 0, %s28
      %s48 = sphi 0, %s50
      %s51 = sphi 0, %s48
      %s52 = sphi 0, %s51
      %s68 = sphi 0, %s52
      %s74 = sphi 0, %s76
      %s77 = sphi 0, %s74
      %s78 = sphi 0, %s77
      %s94 = sphi 0, %s78
      %s100 = sphi 0, %s102
      %s103 = sphi 0, %s100
      %s104 = sphi 0, %s103
      %s120 = sphi 0, %s104
      %s124 = sphi 0, %s124
      %s126 = sphi 0, %s124
      %s127 = sphi 0, %s126
      %s141 = sphi 0, %s127
    $region4: #{encoder_bilstm_forward.1} parent=1 // loop_header_branch
      %20 = sbr.rel (%p18) target = $region8
    $region5: #{encoder_bilstm_forward.1} parent=1 // loop_body
      %s22 = ssub.s32 %s17, 1
      %s23 = ssub.s32 %s17, 2
      %s24 = sadd.s32 %s17, 1
      %s26 = sadd.s32 %s25, 1
      %p29 = scmp.eq.s32.totalorder %s17, 1
      %p30 = scmp.ne.s32.totalorder %s25, %s27
      %p31 = scmp.eq.s32.totalorder %s17, 0
      %p32 = por %p30, %p31
      %p33 = scmp.ne.s32.totalorder %s25, %s27
      %p34 = scmp.eq.s32.totalorder %s22, 1
      %p35 = por %p33, %p34
      %p36 = scmp.ne.s32.totalorder %s27, %s28
      %p37 = scmp.eq.s32.totalorder %s22, 0
      %p38 = por %p36, %p37
      %p39 = scmp.ne.s32.totalorder %s27, %s28
      %p40 = scmp.eq.s32.totalorder %s23, 1
      %p41 = por %p39, %p40
      %p43 = scmp.ne.s32.totalorder %s28, %s42
      %p44 = scmp.eq.s32.totalorder %s23, 0
      %p45 = por %p43, %p44
      %s46 = ssub.s32 %s17, %s24
      %p47 = scmp.eq.s32.totalorder %s46, 0
      %s49 = sadd.s32 %s48, 1
      %s50 = scalar_select %p47, %s48, %s49
      %p53 = pneg %p47
      %p54 = scmp.eq.s32.totalorder %s17, 1
      %p55 = por %p53, %p54
      %p56 = scmp.ne.s32.totalorder %s48, %s51
      %p57 = scmp.eq.s32.totalorder %s17, 0
      %p58 = por %p56, %p57
      %p59 = scmp.ne.s32.totalorder %s48, %s51
      %p60 = scmp.eq.s32.totalorder %s22, 1
      %p61 = por %p59, %p60
      %p62 = scmp.ne.s32.totalorder %s51, %s52
      %p63 = scmp.eq.s32.totalorder %s22, 0
      %p64 = por %p62, %p63
      %p65 = scmp.ne.s32.totalorder %s51, %s52
      %p66 = scmp.eq.s32.totalorder %s23, 1
      %p67 = por %p65, %p66
      %p69 = scmp.ne.s32.totalorder %s52, %s68
      %p70 = scmp.eq.s32.totalorder %s23, 0
      %p71 = por %p69, %p70
      %s72 = ssub.s32 %s17, %s24
      %p73 = scmp.eq.s32.totalorder %s72, 0
      %s75 = sadd.s32 %s74, 1
      %s76 = scalar_select %p73, %s74, %s75
      %p79 = pneg %p73
      %p80 = scmp.eq.s32.totalorder %s17, 1
      %p81 = por %p79, %p80
      %p82 = scmp.ne.s32.totalorder %s74, %s77
      %p83 = scmp.eq.s32.totalorder %s17, 0
      %p84 = por %p82, %p83
      %p85 = scmp.ne.s32.totalorder %s74, %s77
      %p86 = scmp.eq.s32.totalorder %s22, 1
      %p87 = por %p85, %p86
      %p88 = scmp.ne.s32.totalorder %s77, %s78
      %p89 = scmp.eq.s32.totalorder %s22, 0
      %p90 = por %p88, %p89
      %p91 = scmp.ne.s32.totalorder %s77, %s78
      %p92 = scmp.eq.s32.totalorder %s23, 1
      %p93 = por %p91, %p92
      %p95 = scmp.ne.s32.totalorder %s78, %s94
      %p96 = scmp.eq.s32.totalorder %s23, 0
      %p97 = por %p95, %p96
      %s98 = ssub.s32 %s17, %s24
      %p99 = scmp.eq.s32.totalorder %s98, 0
      %s101 = sadd.s32 %s100, 1
      %s102 = scalar_select %p99, %s100, %s101
      %p105 = pneg %p99
      %p106 = scmp.eq.s32.totalorder %s17, 1
      %p107 = por %p105, %p106
      %p108 = scmp.ne.s32.totalorder %s100, %s103
      %p109 = scmp.eq.s32.totalorder %s17, 0
      %p110 = por %p108, %p109
      %p111 = scmp.ne.s32.totalorder %s100, %s103
      %p112 = scmp.eq.s32.totalorder %s22, 1
      %p113 = por %p111, %p112
      %p114 = scmp.ne.s32.totalorder %s103, %s104
      %p115 = scmp.eq.s32.totalorder %s22, 0
      %p116 = por %p114, %p115
      %p117 = scmp.ne.s32.totalorder %s103, %s104
      %p118 = scmp.eq.s32.totalorder %s23, 1
      %p119 = por %p117, %p118
      %p121 = scmp.ne.s32.totalorder %s104, %s120
      %p122 = scmp.eq.s32.totalorder %s23, 0
      %p123 = por %p121, %p122
      %s125 = sadd.s32 %s124, 1
      %p128 = scmp.eq.s32.totalorder %s17, 1
      %p129 = scmp.ne.s32.totalorder %s124, %s126
      %p130 = scmp.eq.s32.totalorder %s17, 0
      %p131 = por %p129, %p130
      %p132 = scmp.ne.s32.totalorder %s124, %s126
      %p133 = scmp.eq.s32.totalorder %s22, 1
      %p134 = por %p132, %p133
      %p135 = scmp.ne.s32.totalorder %s126, %s127
      %p136 = scmp.eq.s32.totalorder %s22, 0
      %p137 = por %p135, %p136
      %p138 = scmp.ne.s32.totalorder %s126, %s127
      %p139 = scmp.eq.s32.totalorder %s23, 1
      %p140 = por %p138, %p139
      %p142 = scmp.ne.s32.totalorder %s127, %s141
      %p143 = scmp.eq.s32.totalorder %s23, 0
      %p144 = por %p142, %p143
      %p145 = scmp.le.s32.totalorder 1, %s17
      %p146 = scmp.lt.s32.totalorder %s17, 3
      %p147 = pnand %p145, %p146
      %p148 = pneg %p147
      // Predicated region
      $region9: #{encoder_bilstm_forward.1} parent=5 // pred_check
        _
      $region10: #{encoder_bilstm_forward.1} parent=5 // pred_check_branch
        %150 = sbr.rel (%p147) target = $region12
      $region11: #{encoder_bilstm_forward.1} parent=5 // pred_region
        %s151 = ssub.s32 %s17, 1
        // Predicated region
        $region13: #{encoder_bilstm_forward.1} parent=11 // pred_check
          %p152 = pneg %p38
        $region14: #{encoder_bilstm_forward.1} parent=11 // pred_check_branch
          %154 = sbr.rel (%p152) target = $region16
        $region15: #{encoder_bilstm_forward.1} parent=11 // pred_region
          _
        $region16: #{encoder_bilstm_forward.1} parent=11 // pred_fallthru
          _
      $region12: #{encoder_bilstm_forward.1} parent=5 // pred_fallthru
        _
      %p155 = scmp.lt.s32.totalorder %s17, 2
      // Predicated region
      $region17: #{encoder_bilstm_forward.1} parent=5 // pred_check
        %p156 = pneg %p155
      $region18: #{encoder_bilstm_forward.1} parent=5 // pred_check_branch
        %158 = sbr.rel (%p156) target = $region20
      $region19: #{encoder_bilstm_forward.1} parent=5 // pred_region
        // Predicated region
        $region21: #{encoder_bilstm_forward.1} parent=19 // pred_check
          %p159 = pneg %p58
        $region22: #{encoder_bilstm_forward.1} parent=19 // pred_check_branch
          %161 = sbr.rel (%p159) target = $region24
        $region23: #{encoder_bilstm_forward.1} parent=19 // pred_region
          %s162 = sand.u32 %s48, 1
          %s163 = scalar_lea.sflag [#allocation5], %s162
          %s164 = sand.u32 %s48, 1
          %s165 = smul.addr %s164, 256
          %s166 = scalar_lea.vmem [#allocation4], %s165
          %s168 = ssub.s32 4096, 4096
          %169 = vsyncadd %s163, %s168
          %s170 = smul.addr %s17, 32
          %s171 = smul.addr %s170, 128
          %s172 = scalar_lea.hbm %s1, %s171
          %s173 = sshll.u32 %s166, 4
          %s174 = int_to_ptr.vmem [resolvable:$true] %s173
          %179 = dma.hbm_to_vmem [thread:$0]  %s172, 4096, %s174, %s163, 256, 256, 16
        $region24: #{encoder_bilstm_forward.1} parent=19 // pred_fallthru
          _
        // Predicated region
        $region25: #{encoder_bilstm_forward.1} parent=19 // pred_check
          %p180 = pneg %p84
        $region26: #{encoder_bilstm_forward.1} parent=19 // pred_check_branch
          %182 = sbr.rel (%p180) target = $region28
        $region27: #{encoder_bilstm_forward.1} parent=19 // pred_region
          %s183 = sand.u32 %s74, 1
          %s184 = scalar_lea.sflag [#allocation8], %s183
          %s185 = sand.u32 %s74, 1
          %s186 = smul.addr %s185, 128
          %s187 = scalar_lea.vmem [#allocation7], %s186
          %s189 = ssub.s32 2048, 2048
          %190 = vsyncadd %s184, %s189
          %s191 = smul.addr %s17, 16
          %s192 = smul.addr %s191, 128
          %s193 = scalar_lea.hbm %s2, %s192
          %s194 = sshll.u32 %s187, 4
          %s195 = int_to_ptr.vmem [resolvable:$true] %s194
          %200 = dma.hbm_to_vmem [thread:$0]  %s193, 2048, %s195, %s184, 256, 256, 16
        $region28: #{encoder_bilstm_forward.1} parent=19 // pred_fallthru
          _
        // Predicated region
        $region29: #{encoder_bilstm_forward.1} parent=19 // pred_check
          %p201 = pneg %p110
        $region30: #{encoder_bilstm_forward.1} parent=19 // pred_check_branch
          %203 = sbr.rel (%p201) target = $region32
        $region31: #{encoder_bilstm_forward.1} parent=19 // pred_region
          %p204 = scmp.lt.s32.totalorder %s17, 1
          %s205 = scalar_select %p204, %s17, 1
          %s206 = smul.addr %s205, 2
          %s207 = scalar_lea.vmem %s3, %s206
        $region32: #{encoder_bilstm_forward.1} parent=19 // pred_fallthru
          _
      $region20: #{encoder_bilstm_forward.1} parent=5 // pred_fallthru
        _
      %p208 = scmp.le.s32.totalorder 1, %s17
      %p209 = scmp.lt.s32.totalorder %s17, 3
      %p210 = pnand %p208, %p209
      %p211 = pneg %p210
      // Predicated region
      $region33: #{encoder_bilstm_forward.1} parent=5 // pred_check
        _
      $region34: #{encoder_bilstm_forward.1} parent=5 // pred_check_branch
        %213 = sbr.rel (%p210) target = $region36
      $region35: #{encoder_bilstm_forward.1} parent=5 // pred_region
        %s214 = ssub.s32 %s17, 1
        %s215 = sand.u32 %s51, 1
        %s216 = scalar_lea.sflag [#allocation5], %s215
        %s217 = sand.u32 %s51, 1
        %s218 = smul.addr %s217, 256
        %s219 = scalar_lea.vmem [#allocation4], %s218
        // Predicated region
        $region37: #{encoder_bilstm_forward.1} parent=35 // pred_check
          %p220 = pneg %p64
        $region38: #{encoder_bilstm_forward.1} parent=35 // pred_check_branch
          %222 = sbr.rel (%p220) target = $region40
        $region39: #{encoder_bilstm_forward.1} parent=35 // pred_region
          %223 = dma.done %s216, 4096
        $region40: #{encoder_bilstm_forward.1} parent=35 // pred_fallthru
          _
        %s224 = sand.u32 %s77, 1
        %s225 = scalar_lea.sflag [#allocation8], %s224
        %s226 = sand.u32 %s77, 1
        %s227 = smul.addr %s226, 128
        %s228 = scalar_lea.vmem [#allocation7], %s227
        // Predicated region
        $region41: #{encoder_bilstm_forward.1} parent=35 // pred_check
          %p229 = pneg %p90
        $region42: #{encoder_bilstm_forward.1} parent=35 // pred_check_branch
          %231 = sbr.rel (%p229) target = $region44
        $region43: #{encoder_bilstm_forward.1} parent=35 // pred_region
          %232 = dma.done %s225, 2048
        $region44: #{encoder_bilstm_forward.1} parent=35 // pred_fallthru
          _
        %p233 = pneg %p38
        %p234 = pneg %p35
        %s235 = sand.u32 %s51, 1
        %s236 = scalar_lea.sflag [#allocation5], %s235
        %s237 = sand.u32 %s51, 1
        %s238 = smul.addr %s237, 256
        %s239 = scalar_lea.vmem [#allocation4], %s238
        %p240 = pneg %p64
        %p241 = pneg %p61
        %s242 = sand.u32 %s77, 1
        %s243 = scalar_lea.sflag [#allocation8], %s242
        %s244 = sand.u32 %s77, 1
        %s245 = smul.addr %s244, 128
        %s246 = scalar_lea.vmem [#allocation7], %s245
        %p247 = pneg %p90
        %p248 = pneg %p87
        %p249 = scmp.lt.s32.totalorder %s22, 1
        %s250 = scalar_select %p249, %s22, 1
        %s251 = smul.addr %s250, 2
        %s252 = scalar_lea.vmem %s3, %s251
        %p253 = pneg %p116
        %p254 = pneg %p113
        %p255 = pneg %p137
        %p256 = pneg %p134
        %p257 = scmp.lt.s32.totalorder %s22, 1
        %s258 = scalar_select %p257, %s22, 1
        %s259 = smul.addr %s258, 2
        %s260 = scalar_lea.vmem %s3, %s259
        %p261 = scmp.lt.s32.totalorder %s22, 0
        %s262 = ssub.s32 0, %s22
        %s263 = scalar_select %p261, %s262, %s22
        %s264 = sand.u32 %s263, 1
        %s265 = ssub.s32 0, %s264
        %s266 = scalar_select %p261, %s265, %s264
        %p267 = scmp.ne.s32.totalorder %s266, 0
        %p268 = scmp.lt.s32.totalorder %s266, 0
        %p269 = pnand %p268, %p267
        %p270 = pneg %p269
        %s271 = sadd.s32 %s266, 2
        %s272 = scalar_select %p270, %s271, %s266
        %s273 = ssub.s32 1, %s272
        %p274 = scmp.eq.s32.totalorder %s22, 0
        // Predicated region
        $region45: #{encoder_bilstm_forward.1} parent=35 // pred_check
          %p275 = pneg %p274
        $region46: #{encoder_bilstm_forward.1} parent=35 // pred_check_branch
          %277 = sbr.rel (%p275) target = $region48
        $region47: #{encoder_bilstm_forward.1} parent=35 // pred_region
          %278 = vst [vmem:[#allocation2] sm:$0xff] 0.0
          %279 = vst [vmem:[#allocation2 + $0x8] sm:$0xff] 0.0
          %v280 = vld [vmem:[%s0] sm:$0xff]
          %v281 = vld [vmem:[%s219] sm:$0xff]
          %v282 = vld [vmem:[%s219 + $0x8] sm:$0xff]
          %v283 = vld [vmem:[%s219 + $0x10] sm:$0xff]
          %v284 = vld [vmem:[%s219 + $0x18] sm:$0xff]
          %v285 = vld [vmem:[%s219 + $0x20] sm:$0xff]
          %v286 = vld [vmem:[%s219 + $0x28] sm:$0xff]
          %v287 = vld [vmem:[%s219 + $0x30] sm:$0xff]
          %v288 = vld [vmem:[%s219 + $0x38] sm:$0xff]
          %v289 = vld [vmem:[%s219 + $0x40] sm:$0xff]
          %v290 = vld [vmem:[%s219 + $0x48] sm:$0xff]
          %v291 = vld [vmem:[%s219 + $0x50] sm:$0xff]
          %v292 = vld [vmem:[%s219 + $0x58] sm:$0xff]
          %v293 = vld [vmem:[%s219 + $0x60] sm:$0xff]
          %v294 = vld [vmem:[%s219 + $0x68] sm:$0xff]
          %v295 = vld [vmem:[%s219 + $0x70] sm:$0xff]
          %v296 = vld [vmem:[%s219 + $0x78] sm:$0xff]
          %v297 = vld [vmem:[%s219 + $0x80] sm:$0xff]
          %v298 = vld [vmem:[%s219 + $0x88] sm:$0xff]
          %v299 = vld [vmem:[%s219 + $0x90] sm:$0xff]
          %v300 = vld [vmem:[%s219 + $0x98] sm:$0xff]
          %v301 = vld [vmem:[%s219 + $0xa0] sm:$0xff]
          %v302 = vld [vmem:[%s219 + $0xa8] sm:$0xff]
          %v303 = vld [vmem:[%s219 + $0xb0] sm:$0xff]
          %v304 = vld [vmem:[%s219 + $0xb8] sm:$0xff]
          %v305 = vld [vmem:[%s219 + $0xc0] sm:$0xff]
          %v306 = vld [vmem:[%s219 + $0xc8] sm:$0xff]
          %v307 = vld [vmem:[%s219 + $0xd0] sm:$0xff]
          %v308 = vld [vmem:[%s219 + $0xd8] sm:$0xff]
          %v309 = vld [vmem:[%s219 + $0xe0] sm:$0xff]
          %v310 = vld [vmem:[%s219 + $0xe8] sm:$0xff]
          %v311 = vld [vmem:[%s219 + $0xf0] sm:$0xff]
          %v312 = vld [vmem:[%s219 + $0xf8] sm:$0xff]
          %v313 = vld [vmem:[%s260] sm:$0x3]
          %v315 = vlaneseq
          %v316 = vshrl.u32 %v315, 7
          %v317 = vsub.s32 0, %v316
          %v318 = vrot.slane %v313, %v317
          %v319 = vlaneseq
          %v320 = vshrl.u32 %v319, 7
          %v321 = vsub.s32 1, %v320
          %v322 = vrot.slane %v313, %v321
          %325 = vmatprep.subr.mxu0 %v282
          %326 = vmatpush1.msra.mxu0 %v281
          %327 = vmatprep.subr.mxu0 %v284
          %328 = vmatpush1.msra.mxu0 %v283
          %329 = vmatprep.subr.mxu0 %v286
          %330 = vmatpush1.msra.mxu0 %v285
          %331 = vmatprep.subr.mxu0 %v288
          %332 = vmatpush1.msra.mxu0 %v287
          %333 = vmatprep.subr.mxu0 %v290
          %334 = vmatpush1.msra.mxu0 %v289
          %335 = vmatprep.subr.mxu0 %v292
          %336 = vmatpush1.msra.mxu0 %v291
          %337 = vmatprep.subr.mxu0 %v294
          %338 = vmatpush1.msra.mxu0 %v293
          %339 = vmatprep.subr.mxu0 %v296
          %340 = vmatpush1.msra.mxu0 %v295
          %341 = vmatprep.subr.mxu0 %v298
          %342 = vmatpush1.msra.mxu0 %v297
          %343 = vmatprep.subr.mxu0 %v300
          %344 = vmatpush1.msra.mxu0 %v299
          %345 = vmatprep.subr.mxu0 %v302
          %346 = vmatpush1.msra.mxu0 %v301
          %347 = vmatprep.subr.mxu0 %v304
          %348 = vmatpush1.msra.mxu0 %v303
          %349 = vmatprep.subr.mxu0 %v306
          %350 = vmatpush1.msra.mxu0 %v305
          %351 = vmatprep.subr.mxu0 %v308
          %352 = vmatpush1.msra.mxu0 %v307
          %353 = vmatprep.subr.mxu0 %v310
          %354 = vmatpush1.msra.mxu0 %v309
          %355 = vmatprep.subr.mxu0 %v312
          %356 = vmatpush1.msra.mxu0 %v311
          %357 = vmatprep.subr.mxu0 0.0
          %358 = vmatpush1.msra.mxu0 0.0
          %359 = vmatprep.subr.mxu0 0.0
          %360 = vmatpush1.msra.mxu0 0.0
          %361 = vmatprep.subr.mxu0 0.0
          %362 = vmatpush1.msra.mxu0 0.0
          %363 = vmatprep.subr.mxu0 0.0
          %364 = vmatpush1.msra.mxu0 0.0
          %365 = vmatprep.subr.mxu0 0.0
          %366 = vmatpush1.msra.mxu0 0.0
          %367 = vmatprep.subr.mxu0 0.0
          %368 = vmatpush1.msra.mxu0 0.0
          %369 = vmatprep.subr.mxu0 0.0
          %370 = vmatpush1.msra.mxu0 0.0
          %371 = vmatprep.subr.mxu0 0.0
          %372 = vmatpush1.msra.mxu0 0.0
          %373 = vmatprep.subr.mxu0 0.0
          %374 = vmatpush1.msra.mxu0 0.0
          %375 = vmatprep.subr.mxu0 0.0
          %376 = vmatpush1.msra.mxu0 0.0
          %377 = vmatprep.subr.mxu0 0.0
          %378 = vmatpush1.msra.mxu0 0.0
          %379 = vmatprep.subr.mxu0 0.0
          %380 = vmatpush1.msra.mxu0 0.0
          %381 = vmatprep.subr.mxu0 0.0
          %382 = vmatpush1.msra.mxu0 0.0
          %383 = vmatprep.subr.mxu0 0.0
          %384 = vmatpush1.msra.mxu0 0.0
          %385 = vmatprep.subr.mxu0 0.0
          %386 = vmatpush1.msra.mxu0 0.0
          %387 = vmatprep.subr.mxu0 0.0
          %388 = vmatpush1.msra.mxu0 0.0
          %389 = vmatprep.mubr.f32.mxu0 0.0
          %390 = vmatmul.mubr.f32.gmra.mrb[0].mxu0 %v280
          %v391 = vpop.f32.mrb[0].mxu0
          %v392 = vadd.f32 %v318, %v391
          %v393 = vpop.f32.mrb[0].mxu0
          %v394 = vadd.f32 %v322, %v393
          %395 = vdwg.mxu0
          %396 = vst [vmem:[#allocation3] sm:$0xff] %v392
          %397 = vst [vmem:[#allocation3 + $0x8] sm:$0xff] %v394
        $region48: #{encoder_bilstm_forward.1} parent=35 // pred_fallthru
          _
        %p398 = scmp.ne.s32.totalorder %s22, 0
        // Predicated region
        $region49: #{encoder_bilstm_forward.1} parent=35 // pred_check
          %p399 = pneg %p398
        $region50: #{encoder_bilstm_forward.1} parent=35 // pred_check_branch
          %401 = sbr.rel (%p399) target = $region52
        $region51: #{encoder_bilstm_forward.1} parent=35 // pred_region
          %s402 = smul.u32 %s272, 8
          %s403 = scalar_lea.vmem [#allocation2], %s402
          %v404 = vld [vmem:[%s403] sm:$0xff]
          %v405 = vld [vmem:[%s219] sm:$0xff]
          %v406 = vld [vmem:[%s219 + $0x8] sm:$0xff]
          %v407 = vld [vmem:[%s219 + $0x10] sm:$0xff]
          %v408 = vld [vmem:[%s219 + $0x18] sm:$0xff]
          %v409 = vld [vmem:[%s219 + $0x20] sm:$0xff]
          %v410 = vld [vmem:[%s219 + $0x28] sm:$0xff]
          %v411 = vld [vmem:[%s219 + $0x30] sm:$0xff]
          %v412 = vld [vmem:[%s219 + $0x38] sm:$0xff]
          %v413 = vld [vmem:[%s219 + $0x40] sm:$0xff]
          %v414 = vld [vmem:[%s219 + $0x48] sm:$0xff]
          %v415 = vld [vmem:[%s219 + $0x50] sm:$0xff]
          %v416 = vld [vmem:[%s219 + $0x58] sm:$0xff]
          %v417 = vld [vmem:[%s219 + $0x60] sm:$0xff]
          %v418 = vld [vmem:[%s219 + $0x68] sm:$0xff]
          %v419 = vld [vmem:[%s219 + $0x70] sm:$0xff]
          %v420 = vld [vmem:[%s219 + $0x78] sm:$0xff]
          %v421 = vld [vmem:[%s219 + $0x80] sm:$0xff]
          %v422 = vld [vmem:[%s219 + $0x88] sm:$0xff]
          %v423 = vld [vmem:[%s219 + $0x90] sm:$0xff]
          %v424 = vld [vmem:[%s219 + $0x98] sm:$0xff]
          %v425 = vld [vmem:[%s219 + $0xa0] sm:$0xff]
          %v426 = vld [vmem:[%s219 + $0xa8] sm:$0xff]
          %v427 = vld [vmem:[%s219 + $0xb0] sm:$0xff]
          %v428 = vld [vmem:[%s219 + $0xb8] sm:$0xff]
          %v429 = vld [vmem:[%s219 + $0xc0] sm:$0xff]
          %v430 = vld [vmem:[%s219 + $0xc8] sm:$0xff]
          %v431 = vld [vmem:[%s219 + $0xd0] sm:$0xff]
          %v432 = vld [vmem:[%s219 + $0xd8] sm:$0xff]
          %v433 = vld [vmem:[%s219 + $0xe0] sm:$0xff]
          %v434 = vld [vmem:[%s219 + $0xe8] sm:$0xff]
          %v435 = vld [vmem:[%s219 + $0xf0] sm:$0xff]
          %v436 = vld [vmem:[%s219 + $0xf8] sm:$0xff]
          %v437 = vld [vmem:[%s260] sm:$0x3]
          %v439 = vlaneseq
          %v440 = vshrl.u32 %v439, 7
          %v441 = vsub.s32 0, %v440
          %v442 = vrot.slane %v437, %v441
          %v443 = vlaneseq
          %v444 = vshrl.u32 %v443, 7
          %v445 = vsub.s32 1, %v444
          %v446 = vrot.slane %v437, %v445
          %449 = vmatprep.subr.mxu0 %v406
          %450 = vmatpush1.msra.mxu0 %v405
          %451 = vmatprep.subr.mxu0 %v408
          %452 = vmatpush1.msra.mxu0 %v407
          %453 = vmatprep.subr.mxu0 %v410
          %454 = vmatpush1.msra.mxu0 %v409
          %455 = vmatprep.subr.mxu0 %v412
          %456 = vmatpush1.msra.mxu0 %v411
          %457 = vmatprep.subr.mxu0 %v414
          %458 = vmatpush1.msra.mxu0 %v413
          %459 = vmatprep.subr.mxu0 %v416
          %460 = vmatpush1.msra.mxu0 %v415
          %461 = vmatprep.subr.mxu0 %v418
          %462 = vmatpush1.msra.mxu0 %v417
          %463 = vmatprep.subr.mxu0 %v420
          %464 = vmatpush1.msra.mxu0 %v419
          %465 = vmatprep.subr.mxu0 %v422
          %466 = vmatpush1.msra.mxu0 %v421
          %467 = vmatprep.subr.mxu0 %v424
          %468 = vmatpush1.msra.mxu0 %v423
          %469 = vmatprep.subr.mxu0 %v426
          %470 = vmatpush1.msra.mxu0 %v425
          %471 = vmatprep.subr.mxu0 %v428
          %472 = vmatpush1.msra.mxu0 %v427
          %473 = vmatprep.subr.mxu0 %v430
          %474 = vmatpush1.msra.mxu0 %v429
          %475 = vmatprep.subr.mxu0 %v432
          %476 = vmatpush1.msra.mxu0 %v431
          %477 = vmatprep.subr.mxu0 %v434
          %478 = vmatpush1.msra.mxu0 %v433
          %479 = vmatprep.subr.mxu0 %v436
          %480 = vmatpush1.msra.mxu0 %v435
          %481 = vmatprep.subr.mxu0 0.0
          %482 = vmatpush1.msra.mxu0 0.0
          %483 = vmatprep.subr.mxu0 0.0
          %484 = vmatpush1.msra.mxu0 0.0
          %485 = vmatprep.subr.mxu0 0.0
          %486 = vmatpush1.msra.mxu0 0.0
          %487 = vmatprep.subr.mxu0 0.0
          %488 = vmatpush1.msra.mxu0 0.0
          %489 = vmatprep.subr.mxu0 0.0
          %490 = vmatpush1.msra.mxu0 0.0
          %491 = vmatprep.subr.mxu0 0.0
          %492 = vmatpush1.msra.mxu0 0.0
          %493 = vmatprep.subr.mxu0 0.0
          %494 = vmatpush1.msra.mxu0 0.0
          %495 = vmatprep.subr.mxu0 0.0
          %496 = vmatpush1.msra.mxu0 0.0
          %497 = vmatprep.subr.mxu0 0.0
          %498 = vmatpush1.msra.mxu0 0.0
          %499 = vmatprep.subr.mxu0 0.0
          %500 = vmatpush1.msra.mxu0 0.0
          %501 = vmatprep.subr.mxu0 0.0
          %502 = vmatpush1.msra.mxu0 0.0
          %503 = vmatprep.subr.mxu0 0.0
          %504 = vmatpush1.msra.mxu0 0.0
          %505 = vmatprep.subr.mxu0 0.0
          %506 = vmatpush1.msra.mxu0 0.0
          %507 = vmatprep.subr.mxu0 0.0
          %508 = vmatpush1.msra.mxu0 0.0
          %509 = vmatprep.subr.mxu0 0.0
          %510 = vmatpush1.msra.mxu0 0.0
          %511 = vmatprep.subr.mxu0 0.0
          %512 = vmatpush1.msra.mxu0 0.0
          %513 = vmatprep.mubr.f32.mxu0 0.0
          %514 = vmatmul.mubr.f32.gmra.mrb[0].mxu0 %v404
          %v515 = vpop.f32.mrb[0].mxu0
          %v516 = vadd.f32 %v442, %v515
          %v517 = vpop.f32.mrb[0].mxu0
          %v518 = vadd.f32 %v446, %v517
          %519 = vdwg.mxu0
          %520 = vst [vmem:[#allocation3] sm:$0xff] %v516
          %521 = vst [vmem:[#allocation3 + $0x8] sm:$0xff] %v518
        $region52: #{encoder_bilstm_forward.1} parent=35 // pred_fallthru
          _
        %v522 = vld [vmem:[%s228] sm:$0xff]
        %v523 = vld [vmem:[%s228 + $0x8] sm:$0xff]
        %v524 = vld [vmem:[%s228 + $0x10] sm:$0xff]
        %v525 = vld [vmem:[%s228 + $0x18] sm:$0xff]
        %v526 = vld [vmem:[%s228 + $0x20] sm:$0xff]
        %v527 = vld [vmem:[%s228 + $0x28] sm:$0xff]
        %v528 = vld [vmem:[%s228 + $0x30] sm:$0xff]
        %v529 = vld [vmem:[%s228 + $0x38] sm:$0xff]
        %v530 = vld [vmem:[%s228 + $0x40] sm:$0xff]
        %v531 = vld [vmem:[%s228 + $0x48] sm:$0xff]
        %v532 = vld [vmem:[%s228 + $0x50] sm:$0xff]
        %v533 = vld [vmem:[%s228 + $0x58] sm:$0xff]
        %v534 = vld [vmem:[%s228 + $0x60] sm:$0xff]
        %v535 = vld [vmem:[%s228 + $0x68] sm:$0xff]
        %v536 = vld [vmem:[%s228 + $0x70] sm:$0xff]
        %v537 = vld [vmem:[%s228 + $0x78] sm:$0xff]
        %vm538 = vcmask 523264
        %v540 = vsel %vm538, 0.0, 0
        %542 = vmatprep.subr.mxu0 %v523
        %543 = vmatpush1.msra.mxu0 %v522
        %544 = vmatprep.subr.mxu0 %v525
        %545 = vmatpush1.msra.mxu0 %v524
        %546 = vmatprep.subr.mxu0 %v527
        %547 = vmatpush1.msra.mxu0 %v526
        %548 = vmatprep.subr.mxu0 %v529
        %549 = vmatpush1.msra.mxu0 %v528
        %550 = vmatprep.subr.mxu0 %v531
        %551 = vmatpush1.msra.mxu0 %v530
        %552 = vmatprep.subr.mxu0 %v533
        %553 = vmatpush1.msra.mxu0 %v532
        %554 = vmatprep.subr.mxu0 %v535
        %555 = vmatpush1.msra.mxu0 %v534
        %556 = vmatprep.subr.mxu0 %v537
        %557 = vmatpush1.msra.mxu0 %v536
        %558 = vmatprep.subr.mxu0 0.0
        %559 = vmatpush1.msra.mxu0 0.0
        %560 = vmatprep.subr.mxu0 0.0
        %561 = vmatpush1.msra.mxu0 0.0
        %562 = vmatprep.subr.mxu0 0.0
        %563 = vmatpush1.msra.mxu0 0.0
        %564 = vmatprep.subr.mxu0 0.0
        %565 = vmatpush1.msra.mxu0 0.0
        %566 = vmatprep.subr.mxu0 0.0
        %567 = vmatpush1.msra.mxu0 0.0
        %568 = vmatprep.subr.mxu0 0.0
        %569 = vmatpush1.msra.mxu0 0.0
        %570 = vmatprep.subr.mxu0 0.0
        %571 = vmatpush1.msra.mxu0 0.0
        %572 = vmatprep.subr.mxu0 0.0
        %573 = vmatpush1.msra.mxu0 0.0
        %574 = vmatprep.subr.mxu0 0.0
        %575 = vmatpush1.msra.mxu0 0.0
        %576 = vmatprep.subr.mxu0 0.0
        %577 = vmatpush1.msra.mxu0 0.0
        %578 = vmatprep.subr.mxu0 0.0
        %579 = vmatpush1.msra.mxu0 0.0
        %580 = vmatprep.subr.mxu0 0.0
        %581 = vmatpush1.msra.mxu0 0.0
        %582 = vmatprep.subr.mxu0 0.0
        %583 = vmatpush1.msra.mxu0 0.0
        %584 = vmatprep.subr.mxu0 0.0
        %585 = vmatpush1.msra.mxu0 0.0
        %586 = vmatprep.subr.mxu0 0.0
        %587 = vmatpush1.msra.mxu0 0.0
        %588 = vmatprep.subr.mxu0 0.0
        %589 = vmatpush1.msra.mxu0 0.0
        %590 = vmatprep.subr.mxu0 0.0
        %591 = vmatpush1.msra.mxu0 0.0
        %592 = vmatprep.subr.mxu0 0.0
        %593 = vmatpush1.msra.mxu0 0.0
        %594 = vmatprep.subr.mxu0 0.0
        %595 = vmatpush1.msra.mxu0 0.0
        %596 = vmatprep.subr.mxu0 0.0
        %597 = vmatpush1.msra.mxu0 0.0
        %598 = vmatprep.subr.mxu0 0.0
        %599 = vmatpush1.msra.mxu0 0.0
        %600 = vmatprep.subr.mxu0 0.0
        %601 = vmatpush1.msra.mxu0 0.0
        %602 = vmatprep.subr.mxu0 0.0
        %603 = vmatpush1.msra.mxu0 0.0
        %604 = vmatprep.subr.mxu0 0.0
        %605 = vmatpush1.msra.mxu0 0.0
        %606 = vmatprep.mubr.f32.mxu0 0.0
        %607 = vmatmul.mubr.f32.gmra.mrb[0].mxu0 %v540
        %v608 = vpop.f32.mrb[0].mxu0
        %v609 = vadd.f32 0.0, %v608
        %v610 = vpop.f32.mrb[0].mxu0
        %v611 = vadd.f32 0.0, %v610
        %612 = vdwg.mxu0
        %v613 = vld [vmem:[#allocation3] ss:$0 sm:$0xff]
        %v614 = vadd.f32 %v613, %v609
        %v615 = vld [vmem:[#allocation3 + $0xf] ss:$0 sm:$0xff]
        %v616 = vadd.f32 %v615, %v611
        %v617 = vxor.u32 %v614, 2147483648
        %v618 = vmul.f32 %v617, 1.442695
        %v619 = vpow.pop %v618
        %v620 = vadd.f32 %v619, 1.0
        %v621 = vrcp.pop %v620
        %v622 = vmul.f32 1.0, %v621
        %v623 = vtanh.pop %v614
        %v624 = vmul.f32 %v622, 0.0
        %626 = vrot.lane.b32.xlu0 %v623, 32
        %v627 = vpop.permute.xlu0 %626
        %v629 = vmul.f32 %v622, %v627
        %631 = vrot.lane.b32.xlu0 %v629, 32
        %v632 = vpop.permute.xlu0 %631
        %v634 = vadd.f32 %v624, %v632
        %v635 = vtanh.pop %v634
        %637 = vrot.lane.b32.xlu0 %v635, 32
        %v638 = vpop.permute.xlu0 %637
        %v640 = vmul.f32 %v622, %v638
        %v641 = vxor.u32 %v616, 2147483648
        %v642 = vmul.f32 %v641, 1.442695
        %v643 = vpow.pop %v642
        %v644 = vadd.f32 %v643, 1.0
        %v645 = vrcp.pop %v644
        %v646 = vmul.f32 1.0, %v645
        %v647 = vtanh.pop %v616
        %v648 = vmul.f32 %v646, 0.0
        %650 = vrot.lane.b32.xlu0 %v647, 32
        %v651 = vpop.permute.xlu0 %650
        %v653 = vmul.f32 %v646, %v651
        %655 = vrot.lane.b32.xlu0 %v653, 32
        %v656 = vpop.permute.xlu0 %655
        %v658 = vadd.f32 %v648, %v656
        %v659 = vtanh.pop %v658
        %661 = vrot.lane.b32.xlu0 %v659, 32
        %v662 = vpop.permute.xlu0 %661
        %v664 = vmul.f32 %v646, %v662
        %666 = vrot.lane.b32.xlu0 %v640, 64
        %v667 = vpop.permute.xlu0 %666
        %s669 = smul.u32 %s273, 8
        %s670 = scalar_lea.vmem [#allocation2], %s669
        %vm671 = vcmask 253952
        %672 = vst.msk [vmem:[%s670] sm:$0x1] %vm671, %v667
        %674 = vrot.lane.b32.xlu0 %v664, 96
        %v675 = vpop.permute.xlu0 %674
        %vm677 = vcmask 516352
        %678 = vst.msk [vmem:[%s670 + $0x7] sm:$0x1] %vm677, %v675
        %vm679 = vcmask 261120
        %v680 = vsel %vm679, %v667, %v675
        %v682 = vsel %vm538, %v680, 0
        %684 = vmatprep.subr.mxu0 %v523
        %685 = vmatpush1.msra.mxu0 %v522
        %686 = vmatprep.subr.mxu0 %v525
        %687 = vmatpush1.msra.mxu0 %v524
        %688 = vmatprep.subr.mxu0 %v527
        %689 = vmatpush1.msra.mxu0 %v526
        %690 = vmatprep.subr.mxu0 %v529
        %691 = vmatpush1.msra.mxu0 %v528
        %692 = vmatprep.subr.mxu0 %v531
        %693 = vmatpush1.msra.mxu0 %v530
        %694 = vmatprep.subr.mxu0 %v533
        %695 = vmatpush1.msra.mxu0 %v532
        %696 = vmatprep.subr.mxu0 %v535
        %697 = vmatpush1.msra.mxu0 %v534
        %698 = vmatprep.subr.mxu0 %v537
        %699 = vmatpush1.msra.mxu0 %v536
        %700 = vmatprep.subr.mxu0 0.0
        %701 = vmatpush1.msra.mxu0 0.0
        %702 = vmatprep.subr.mxu0 0.0
        %703 = vmatpush1.msra.mxu0 0.0
        %704 = vmatprep.subr.mxu0 0.0
        %705 = vmatpush1.msra.mxu0 0.0
        %706 = vmatprep.subr.mxu0 0.0
        %707 = vmatpush1.msra.mxu0 0.0
        %708 = vmatprep.subr.mxu0 0.0
        %709 = vmatpush1.msra.mxu0 0.0
        %710 = vmatprep.subr.mxu0 0.0
        %711 = vmatpush1.msra.mxu0 0.0
        %712 = vmatprep.subr.mxu0 0.0
        %713 = vmatpush1.msra.mxu0 0.0
        %714 = vmatprep.subr.mxu0 0.0
        %715 = vmatpush1.msra.mxu0 0.0
        %716 = vmatprep.subr.mxu0 0.0
        %717 = vmatpush1.msra.mxu0 0.0
        %718 = vmatprep.subr.mxu0 0.0
        %719 = vmatpush1.msra.mxu0 0.0
        %720 = vmatprep.subr.mxu0 0.0
        %721 = vmatpush1.msra.mxu0 0.0
        %722 = vmatprep.subr.mxu0 0.0
        %723 = vmatpush1.msra.mxu0 0.0
        %724 = vmatprep.subr.mxu0 0.0
        %725 = vmatpush1.msra.mxu0 0.0
        %726 = vmatprep.subr.mxu0 0.0
        %727 = vmatpush1.msra.mxu0 0.0
        %728 = vmatprep.subr.mxu0 0.0
        %729 = vmatpush1.msra.mxu0 0.0
        %730 = vmatprep.subr.mxu0 0.0
        %731 = vmatpush1.msra.mxu0 0.0
        %732 = vmatprep.subr.mxu0 0.0
        %733 = vmatpush1.msra.mxu0 0.0
        %734 = vmatprep.subr.mxu0 0.0
        %735 = vmatpush1.msra.mxu0 0.0
        %736 = vmatprep.subr.mxu0 0.0
        %737 = vmatpush1.msra.mxu0 0.0
        %738 = vmatprep.subr.mxu0 0.0
        %739 = vmatpush1.msra.mxu0 0.0
        %740 = vmatprep.subr.mxu0 0.0
        %741 = vmatpush1.msra.mxu0 0.0
        %742 = vmatprep.subr.mxu0 0.0
        %743 = vmatpush1.msra.mxu0 0.0
        %744 = vmatprep.subr.mxu0 0.0
        %745 = vmatpush1.msra.mxu0 0.0
        %746 = vmatprep.subr.mxu0 0.0
        %747 = vmatpush1.msra.mxu0 0.0
        %748 = vmatprep.mubr.f32.mxu0 0.0
        %749 = vmatmul.mubr.f32.gmra.mrb[0].mxu0 %v682
        %v750 = vpop.f32.mrb[0].mxu0
        %v751 = vadd.f32 0.0, %v750
        %v752 = vpop.f32.mrb[0].mxu0
        %v753 = vadd.f32 0.0, %v752
        %754 = vdwg.mxu0
        %v755 = vld [vmem:[#allocation3 + $0x1] ss:$0 sm:$0xff]
        %v756 = vadd.f32 %v755, %v751
        %v757 = vld [vmem:[#allocation3 + $0xe] ss:$0 sm:$0xff]
        %v758 = vadd.f32 %v757, %v753
        %v759 = vxor.u32 %v756, 2147483648
        %v760 = vmul.f32 %v759, 1.442695
        %v761 = vpow.pop %v760
        %v762 = vadd.f32 %v761, 1.0
        %v763 = vrcp.pop %v762
        %v764 = vmul.f32 1.0, %v763
        %v765 = vtanh.pop %v756
        %v766 = vmul.f32 %v764, %v634
        %768 = vrot.lane.b32.xlu0 %v765, 32
        %v769 = vpop.permute.xlu0 %768
        %v771 = vmul.f32 %v764, %v769
        %773 = vrot.lane.b32.xlu0 %v771, 32
        %v774 = vpop.permute.xlu0 %773
        %v776 = vadd.f32 %v766, %v774
        %v777 = vtanh.pop %v776
        %779 = vrot.lane.b32.xlu0 %v777, 32
        %v780 = vpop.permute.xlu0 %779
        %v782 = vmul.f32 %v764, %v780
        %v783 = vxor.u32 %v758, 2147483648
        %v784 = vmul.f32 %v783, 1.442695
        %v785 = vpow.pop %v784
        %v786 = vadd.f32 %v785, 1.0
        %v787 = vrcp.pop %v786
        %v788 = vmul.f32 1.0, %v787
        %v789 = vtanh.pop %v758
        %v790 = vmul.f32 %v788, %v658
        %792 = vrot.lane.b32.xlu0 %v789, 32
        %v793 = vpop.permute.xlu0 %792
        %v795 = vmul.f32 %v788, %v793
        %797 = vrot.lane.b32.xlu0 %v795, 32
        %v798 = vpop.permute.xlu0 %797
        %v800 = vadd.f32 %v790, %v798
        %v801 = vtanh.pop %v800
        %803 = vrot.lane.b32.xlu0 %v801, 32
        %v804 = vpop.permute.xlu0 %803
        %v806 = vmul.f32 %v788, %v804
        %808 = vrot.lane.b32.xlu0 %v782, 64
        %v809 = vpop.permute.xlu0 %808
        %811 = vst.msk [vmem:[%s670 + $0x1] sm:$0x1] %vm671, %v809
        %813 = vrot.lane.b32.xlu0 %v806, 96
        %v814 = vpop.permute.xlu0 %813
        %816 = vst.msk [vmem:[%s670 + $0x6] sm:$0x1] %vm677, %v814
        %v817 = vsel %vm679, %v809, %v814
        %v819 = vsel %vm538, %v817, 0
        %821 = vmatprep.subr.mxu0 %v523
        %822 = vmatpush1.msra.mxu0 %v522
        %823 = vmatprep.subr.mxu0 %v525
        %824 = vmatpush1.msra.mxu0 %v524
        %825 = vmatprep.subr.mxu0 %v527
        %826 = vmatpush1.msra.mxu0 %v526
        %827 = vmatprep.subr.mxu0 %v529
        %828 = vmatpush1.msra.mxu0 %v528
        %829 = vmatprep.subr.mxu0 %v531
        %830 = vmatpush1.msra.mxu0 %v530
        %831 = vmatprep.subr.mxu0 %v533
        %832 = vmatpush1.msra.mxu0 %v532
        %833 = vmatprep.subr.mxu0 %v535
        %834 = vmatpush1.msra.mxu0 %v534
        %835 = vmatprep.subr.mxu0 %v537
        %836 = vmatpush1.msra.mxu0 %v536
        %837 = vmatprep.subr.mxu0 0.0
        %838 = vmatpush1.msra.mxu0 0.0
        %839 = vmatprep.subr.mxu0 0.0
        %840 = vmatpush1.msra.mxu0 0.0
        %841 = vmatprep.subr.mxu0 0.0
        %842 = vmatpush1.msra.mxu0 0.0
        %843 = vmatprep.subr.mxu0 0.0
        %844 = vmatpush1.msra.mxu0 0.0
        %845 = vmatprep.subr.mxu0 0.0
        %846 = vmatpush1.msra.mxu0 0.0
        %847 = vmatprep.subr.mxu0 0.0
        %848 = vmatpush1.msra.mxu0 0.0
        %849 = vmatprep.subr.mxu0 0.0
        %850 = vmatpush1.msra.mxu0 0.0
        %851 = vmatprep.subr.mxu0 0.0
        %852 = vmatpush1.msra.mxu0 0.0
        %853 = vmatprep.subr.mxu0 0.0
        %854 = vmatpush1.msra.mxu0 0.0
        %855 = vmatprep.subr.mxu0 0.0
        %856 = vmatpush1.msra.mxu0 0.0
        %857 = vmatprep.subr.mxu0 0.0
        %858 = vmatpush1.msra.mxu0 0.0
        %859 = vmatprep.subr.mxu0 0.0
        %860 = vmatpush1.msra.mxu0 0.0
        %861 = vmatprep.subr.mxu0 0.0
        %862 = vmatpush1.msra.mxu0 0.0
        %863 = vmatprep.subr.mxu0 0.0
        %864 = vmatpush1.msra.mxu0 0.0
        %865 = vmatprep.subr.mxu0 0.0
        %866 = vmatpush1.msra.mxu0 0.0
        %867 = vmatprep.subr.mxu0 0.0
        %868 = vmatpush1.msra.mxu0 0.0
        %869 = vmatprep.subr.mxu0 0.0
        %870 = vmatpush1.msra.mxu0 0.0
        %871 = vmatprep.subr.mxu0 0.0
        %872 = vmatpush1.msra.mxu0 0.0
        %873 = vmatprep.subr.mxu0 0.0
        %874 = vmatpush1.msra.mxu0 0.0
        %875 = vmatprep.subr.mxu0 0.0
        %876 = vmatpush1.msra.mxu0 0.0
        %877 = vmatprep.subr.mxu0 0.0
        %878 = vmatpush1.msra.mxu0 0.0
        %879 = vmatprep.subr.mxu0 0.0
        %880 = vmatpush1.msra.mxu0 0.0
        %881 = vmatprep.subr.mxu0 0.0
        %882 = vmatpush1.msra.mxu0 0.0
        %883 = vmatprep.subr.mxu0 0.0
        %884 = vmatpush1.msra.mxu0 0.0
        %885 = vmatprep.mubr.f32.mxu0 0.0
        %886 = vmatmul.mubr.f32.gmra.mrb[0].mxu0 %v819
        %v887 = vpop.f32.mrb[0].mxu0
        %v888 = vadd.f32 0.0, %v887
        %v889 = vpop.f32.mrb[0].mxu0
        %v890 = vadd.f32 0.0, %v889
        %891 = vdwg.mxu0
        %v892 = vld [vmem:[#allocation3 + $0x2] ss:$0 sm:$0xff]
        %v893 = vadd.f32 %v892, %v888
        %v894 = vld [vmem:[#allocation3 + $0xd] ss:$0 sm:$0xff]
        %v895 = vadd.f32 %v894, %v890
        %v896 = vxor.u32 %v893, 2147483648
        %v897 = vmul.f32 %v896, 1.442695
        %v898 = vpow.pop %v897
        %v899 = vadd.f32 %v898, 1.0
        %v900 = vrcp.pop %v899
        %v901 = vmul.f32 1.0, %v900
        %v902 = vtanh.pop %v893
        %v903 = vmul.f32 %v901, %v776
        %905 = vrot.lane.b32.xlu0 %v902, 32
        %v906 = vpop.permute.xlu0 %905
        %v908 = vmul.f32 %v901, %v906
        %910 = vrot.lane.b32.xlu0 %v908, 32
        %v911 = vpop.permute.xlu0 %910
        %v913 = vadd.f32 %v903, %v911
        %v914 = vtanh.pop %v913
        %916 = vrot.lane.b32.xlu0 %v914, 32
        %v917 = vpop.permute.xlu0 %916
        %v919 = vmul.f32 %v901, %v917
        %v920 = vxor.u32 %v895, 2147483648
        %v921 = vmul.f32 %v920, 1.442695
        %v922 = vpow.pop %v921
        %v923 = vadd.f32 %v922, 1.0
        %v924 = vrcp.pop %v923
        %v925 = vmul.f32 1.0, %v924
        %v926 = vtanh.pop %v895
        %v927 = vmul.f32 %v925, %v800
        %929 = vrot.lane.b32.xlu0 %v926, 32
        %v930 = vpop.permute.xlu0 %929
        %v932 = vmul.f32 %v925, %v930
        %934 = vrot.lane.b32.xlu0 %v932, 32
        %v935 = vpop.permute.xlu0 %934
        %v937 = vadd.f32 %v927, %v935
        %v938 = vtanh.pop %v937
        %940 = vrot.lane.b32.xlu0 %v938, 32
        %v941 = vpop.permute.xlu0 %940
        %v943 = vmul.f32 %v925, %v941
        %945 = vrot.lane.b32.xlu0 %v919, 64
        %v946 = vpop.permute.xlu0 %945
        %948 = vst.msk [vmem:[%s670 + $0x2] sm:$0x1] %vm671, %v946
        %950 = vrot.lane.b32.xlu0 %v943, 96
        %v951 = vpop.permute.xlu0 %950
        %953 = vst.msk [vmem:[%s670 + $0x5] sm:$0x1] %vm677, %v951
        %v954 = vsel %vm679, %v946, %v951
        %v956 = vsel %vm538, %v954, 0
        %958 = vmatprep.subr.mxu0 %v523
        %959 = vmatpush1.msra.mxu0 %v522
        %960 = vmatprep.subr.mxu0 %v525
        %961 = vmatpush1.msra.mxu0 %v524
        %962 = vmatprep.subr.mxu0 %v527
        %963 = vmatpush1.msra.mxu0 %v526
        %964 = vmatprep.subr.mxu0 %v529
        %965 = vmatpush1.msra.mxu0 %v528
        %966 = vmatprep.subr.mxu0 %v531
        %967 = vmatpush1.msra.mxu0 %v530
        %968 = vmatprep.subr.mxu0 %v533
        %969 = vmatpush1.msra.mxu0 %v532
        %970 = vmatprep.subr.mxu0 %v535
        %971 = vmatpush1.msra.mxu0 %v534
        %972 = vmatprep.subr.mxu0 %v537
        %973 = vmatpush1.msra.mxu0 %v536
        %974 = vmatprep.subr.mxu0 0.0
        %975 = vmatpush1.msra.mxu0 0.0
        %976 = vmatprep.subr.mxu0 0.0
        %977 = vmatpush1.msra.mxu0 0.0
        %978 = vmatprep.subr.mxu0 0.0
        %979 = vmatpush1.msra.mxu0 0.0
        %980 = vmatprep.subr.mxu0 0.0
        %981 = vmatpush1.msra.mxu0 0.0
        %982 = vmatprep.subr.mxu0 0.0
        %983 = vmatpush1.msra.mxu0 0.0
        %984 = vmatprep.subr.mxu0 0.0
        %985 = vmatpush1.msra.mxu0 0.0
        %986 = vmatprep.subr.mxu0 0.0
        %987 = vmatpush1.msra.mxu0 0.0
        %988 = vmatprep.subr.mxu0 0.0
        %989 = vmatpush1.msra.mxu0 0.0
        %990 = vmatprep.subr.mxu0 0.0
        %991 = vmatpush1.msra.mxu0 0.0
        %992 = vmatprep.subr.mxu0 0.0
        %993 = vmatpush1.msra.mxu0 0.0
        %994 = vmatprep.subr.mxu0 0.0
        %995 = vmatpush1.msra.mxu0 0.0
        %996 = vmatprep.subr.mxu0 0.0
        %997 = vmatpush1.msra.mxu0 0.0
        %998 = vmatprep.subr.mxu0 0.0
        %999 = vmatpush1.msra.mxu0 0.0
        %1000 = vmatprep.subr.mxu0 0.0
        %1001 = vmatpush1.msra.mxu0 0.0
        %1002 = vmatprep.subr.mxu0 0.0
        %1003 = vmatpush1.msra.mxu0 0.0
        %1004 = vmatprep.subr.mxu0 0.0
        %1005 = vmatpush1.msra.mxu0 0.0
        %1006 = vmatprep.subr.mxu0 0.0
        %1007 = vmatpush1.msra.mxu0 0.0
        %1008 = vmatprep.subr.mxu0 0.0
        %1009 = vmatpush1.msra.mxu0 0.0
        %1010 = vmatprep.subr.mxu0 0.0
        %1011 = vmatpush1.msra.mxu0 0.0
        %1012 = vmatprep.subr.mxu0 0.0
        %1013 = vmatpush1.msra.mxu0 0.0
        %1014 = vmatprep.subr.mxu0 0.0
        %1015 = vmatpush1.msra.mxu0 0.0
        %1016 = vmatprep.subr.mxu0 0.0
        %1017 = vmatpush1.msra.mxu0 0.0
        %1018 = vmatprep.subr.mxu0 0.0
        %1019 = vmatpush1.msra.mxu0 0.0
        %1020 = vmatprep.subr.mxu0 0.0
        %1021 = vmatpush1.msra.mxu0 0.0
        %1022 = vmatprep.mubr.f32.mxu0 0.0
        %1023 = vmatmul.mubr.f32.gmra.mrb[0].mxu0 %v956
        %v1024 = vpop.f32.mrb[0].mxu0
        %v1025 = vadd.f32 0.0, %v1024
        %v1026 = vpop.f32.mrb[0].mxu0
        %v1027 = vadd.f32 0.0, %v1026
        %1028 = vdwg.mxu0
        %v1029 = vld [vmem:[#allocation3 + $0x3] ss:$0 sm:$0xff]
        %v1030 = vadd.f32 %v1029, %v1025
        %v1031 = vld [vmem:[#allocation3 + $0xc] ss:$0 sm:$0xff]
        %v1032 = vadd.f32 %v1031, %v1027
        %v1033 = vxor.u32 %v1030, 2147483648
        %v1034 = vmul.f32 %v1033, 1.442695
        %v1035 = vpow.pop %v1034
        %v1036 = vadd.f32 %v1035, 1.0
        %v1037 = vrcp.pop %v1036
        %v1038 = vmul.f32 1.0, %v1037
        %v1039 = vtanh.pop %v1030
        %v1040 = vmul.f32 %v1038, %v913
        %1042 = vrot.lane.b32.xlu0 %v1039, 32
        %v1043 = vpop.permute.xlu0 %1042
        %v1045 = vmul.f32 %v1038, %v1043
        %1047 = vrot.lane.b32.xlu0 %v1045, 32
        %v1048 = vpop.permute.xlu0 %1047
        %v1050 = vadd.f32 %v1040, %v1048
        %v1051 = vtanh.pop %v1050
        %1053 = vrot.lane.b32.xlu0 %v1051, 32
        %v1054 = vpop.permute.xlu0 %1053
        %v1056 = vmul.f32 %v1038, %v1054
        %v1057 = vxor.u32 %v1032, 2147483648
        %v1058 = vmul.f32 %v1057, 1.442695
        %v1059 = vpow.pop %v1058
        %v1060 = vadd.f32 %v1059, 1.0
        %v1061 = vrcp.pop %v1060
        %v1062 = vmul.f32 1.0, %v1061
        %v1063 = vtanh.pop %v1032
        %v1064 = vmul.f32 %v1062, %v937
        %1066 = vrot.lane.b32.xlu0 %v1063, 32
        %v1067 = vpop.permute.xlu0 %1066
        %v1069 = vmul.f32 %v1062, %v1067
        %1071 = vrot.lane.b32.xlu0 %v1069, 32
        %v1072 = vpop.permute.xlu0 %1071
        %v1074 = vadd.f32 %v1064, %v1072
        %v1075 = vtanh.pop %v1074
        %1077 = vrot.lane.b32.xlu0 %v1075, 32
        %v1078 = vpop.permute.xlu0 %1077
        %v1080 = vmul.f32 %v1062, %v1078
        %1082 = vrot.lane.b32.xlu0 %v1056, 64
        %v1083 = vpop.permute.xlu0 %1082
        %1085 = vst.msk [vmem:[%s670 + $0x3] sm:$0x1] %vm671, %v1083
        %1087 = vrot.lane.b32.xlu0 %v1080, 96
        %v1088 = vpop.permute.xlu0 %1087
        %1090 = vst.msk [vmem:[%s670 + $0x4] sm:$0x1] %vm677, %v1088
        %v1091 = vsel %vm679, %v1083, %v1088
        %v1093 = vsel %vm538, %v1091, 0
        %1095 = vmatprep.subr.mxu0 %v523
        %1096 = vmatpush1.msra.mxu0 %v522
        %1097 = vmatprep.subr.mxu0 %v525
        %1098 = vmatpush1.msra.mxu0 %v524
        %1099 = vmatprep.subr.mxu0 %v527
        %1100 = vmatpush1.msra.mxu0 %v526
        %1101 = vmatprep.subr.mxu0 %v529
        %1102 = vmatpush1.msra.mxu0 %v528
        %1103 = vmatprep.subr.mxu0 %v531
        %1104 = vmatpush1.msra.mxu0 %v530
        %1105 = vmatprep.subr.mxu0 %v533
        %1106 = vmatpush1.msra.mxu0 %v532
        %1107 = vmatprep.subr.mxu0 %v535
        %1108 = vmatpush1.msra.mxu0 %v534
        %1109 = vmatprep.subr.mxu0 %v537
        %1110 = vmatpush1.msra.mxu0 %v536
        %1111 = vmatprep.subr.mxu0 0.0
        %1112 = vmatpush1.msra.mxu0 0.0
        %1113 = vmatprep.subr.mxu0 0.0
        %1114 = vmatpush1.msra.mxu0 0.0
        %1115 = vmatprep.subr.mxu0 0.0
        %1116 = vmatpush1.msra.mxu0 0.0
        %1117 = vmatprep.subr.mxu0 0.0
        %1118 = vmatpush1.msra.mxu0 0.0
        %1119 = vmatprep.subr.mxu0 0.0
        %1120 = vmatpush1.msra.mxu0 0.0
        %1121 = vmatprep.subr.mxu0 0.0
        %1122 = vmatpush1.msra.mxu0 0.0
        %1123 = vmatprep.subr.mxu0 0.0
        %1124 = vmatpush1.msra.mxu0 0.0
        %1125 = vmatprep.subr.mxu0 0.0
        %1126 = vmatpush1.msra.mxu0 0.0
        %1127 = vmatprep.subr.mxu0 0.0
        %1128 = vmatpush1.msra.mxu0 0.0
        %1129 = vmatprep.subr.mxu0 0.0
        %1130 = vmatpush1.msra.mxu0 0.0
        %1131 = vmatprep.subr.mxu0 0.0
        %1132 = vmatpush1.msra.mxu0 0.0
        %1133 = vmatprep.subr.mxu0 0.0
        %1134 = vmatpush1.msra.mxu0 0.0
        %1135 = vmatprep.subr.mxu0 0.0
        %1136 = vmatpush1.msra.mxu0 0.0
        %1137 = vmatprep.subr.mxu0 0.0
        %1138 = vmatpush1.msra.mxu0 0.0
        %1139 = vmatprep.subr.mxu0 0.0
        %1140 = vmatpush1.msra.mxu0 0.0
        %1141 = vmatprep.subr.mxu0 0.0
        %1142 = vmatpush1.msra.mxu0 0.0
        %1143 = vmatprep.subr.mxu0 0.0
        %1144 = vmatpush1.msra.mxu0 0.0
        %1145 = vmatprep.subr.mxu0 0.0
        %1146 = vmatpush1.msra.mxu0 0.0
        %1147 = vmatprep.subr.mxu0 0.0
        %1148 = vmatpush1.msra.mxu0 0.0
        %1149 = vmatprep.subr.mxu0 0.0
        %1150 = vmatpush1.msra.mxu0 0.0
        %1151 = vmatprep.subr.mxu0 0.0
        %1152 = vmatpush1.msra.mxu0 0.0
        %1153 = vmatprep.subr.mxu0 0.0
        %1154 = vmatpush1.msra.mxu0 0.0
        %1155 = vmatprep.subr.mxu0 0.0
        %1156 = vmatpush1.msra.mxu0 0.0
        %1157 = vmatprep.subr.mxu0 0.0
        %1158 = vmatpush1.msra.mxu0 0.0
        %1159 = vmatprep.mubr.f32.mxu0 0.0
        %1160 = vmatmul.mubr.f32.gmra.mrb[0].mxu0 %v1093
        %v1161 = vpop.f32.mrb[0].mxu0
        %v1162 = vadd.f32 0.0, %v1161
        %v1163 = vpop.f32.mrb[0].mxu0
        %v1164 = vadd.f32 0.0, %v1163
        %1165 = vdwg.mxu0
        %v1166 = vld [vmem:[#allocation3 + $0x4] ss:$0 sm:$0xff]
        %v1167 = vadd.f32 %v1166, %v1162
        %v1168 = vld [vmem:[#allocation3 + $0xb] ss:$0 sm:$0xff]
        %v1169 = vadd.f32 %v1168, %v1164
        %v1170 = vxor.u32 %v1167, 2147483648
        %v1171 = vmul.f32 %v1170, 1.442695
        %v1172 = vpow.pop %v1171
        %v1173 = vadd.f32 %v1172, 1.0
        %v1174 = vrcp.pop %v1173
        %v1175 = vmul.f32 1.0, %v1174
        %v1176 = vtanh.pop %v1167
        %v1177 = vmul.f32 %v1175, %v1050
        %1179 = vrot.lane.b32.xlu0 %v1176, 32
        %v1180 = vpop.permute.xlu0 %1179
        %v1182 = vmul.f32 %v1175, %v1180
        %1184 = vrot.lane.b32.xlu0 %v1182, 32
        %v1185 = vpop.permute.xlu0 %1184
        %v1187 = vadd.f32 %v1177, %v1185
        %v1188 = vtanh.pop %v1187
        %1190 = vrot.lane.b32.xlu0 %v1188, 32
        %v1191 = vpop.permute.xlu0 %1190
        %v1193 = vmul.f32 %v1175, %v1191
        %v1194 = vxor.u32 %v1169, 2147483648
        %v1195 = vmul.f32 %v1194, 1.442695
        %v1196 = vpow.pop %v1195
        %v1197 = vadd.f32 %v1196, 1.0
        %v1198 = vrcp.pop %v1197
        %v1199 = vmul.f32 1.0, %v1198
        %v1200 = vtanh.pop %v1169
        %v1201 = vmul.f32 %v1199, %v1074
        %1203 = vrot.lane.b32.xlu0 %v1200, 32
        %v1204 = vpop.permute.xlu0 %1203
        %v1206 = vmul.f32 %v1199, %v1204
        %1208 = vrot.lane.b32.xlu0 %v1206, 32
        %v1209 = vpop.permute.xlu0 %1208
        %v1211 = vadd.f32 %v1201, %v1209
        %v1212 = vtanh.pop %v1211
        %1214 = vrot.lane.b32.xlu0 %v1212, 32
        %v1215 = vpop.permute.xlu0 %1214
        %v1217 = vmul.f32 %v1199, %v1215
        %1219 = vrot.lane.b32.xlu0 %v1193, 64
        %v1220 = vpop.permute.xlu0 %1219
        %1222 = vst.msk [vmem:[%s670 + $0x4] sm:$0x1] %vm671, %v1220
        %1224 = vrot.lane.b32.xlu0 %v1217, 96
        %v1225 = vpop.permute.xlu0 %1224
        %1227 = vst.msk [vmem:[%s670 + $0x3] sm:$0x1] %vm677, %v1225
        %v1228 = vsel %vm679, %v1220, %v1225
        %v1230 = vsel %vm538, %v1228, 0
        %1232 = vmatprep.subr.mxu0 %v523
        %1233 = vmatpush1.msra.mxu0 %v522
        %1234 = vmatprep.subr.mxu0 %v525
        %1235 = vmatpush1.msra.mxu0 %v524
        %1236 = vmatprep.subr.mxu0 %v527
        %1237 = vmatpush1.msra.mxu0 %v526
        %1238 = vmatprep.subr.mxu0 %v529
        %1239 = vmatpush1.msra.mxu0 %v528
        %1240 = vmatprep.subr.mxu0 %v531
        %1241 = vmatpush1.msra.mxu0 %v530
        %1242 = vmatprep.subr.mxu0 %v533
        %1243 = vmatpush1.msra.mxu0 %v532
        %1244 = vmatprep.subr.mxu0 %v535
        %1245 = vmatpush1.msra.mxu0 %v534
        %1246 = vmatprep.subr.mxu0 %v537
        %1247 = vmatpush1.msra.mxu0 %v536
        %1248 = vmatprep.subr.mxu0 0.0
        %1249 = vmatpush1.msra.mxu0 0.0
        %1250 = vmatprep.subr.mxu0 0.0
        %1251 = vmatpush1.msra.mxu0 0.0
        %1252 = vmatprep.subr.mxu0 0.0
        %1253 = vmatpush1.msra.mxu0 0.0
        %1254 = vmatprep.subr.mxu0 0.0
        %1255 = vmatpush1.msra.mxu0 0.0
        %1256 = vmatprep.subr.mxu0 0.0
        %1257 = vmatpush1.msra.mxu0 0.0
        %1258 = vmatprep.subr.mxu0 0.0
        %1259 = vmatpush1.msra.mxu0 0.0
        %1260 = vmatprep.subr.mxu0 0.0
        %1261 = vmatpush1.msra.mxu0 0.0
        %1262 = vmatprep.subr.mxu0 0.0
        %1263 = vmatpush1.msra.mxu0 0.0
        %1264 = vmatprep.subr.mxu0 0.0
        %1265 = vmatpush1.msra.mxu0 0.0
        %1266 = vmatprep.subr.mxu0 0.0
        %1267 = vmatpush1.msra.mxu0 0.0
        %1268 = vmatprep.subr.mxu0 0.0
        %1269 = vmatpush1.msra.mxu0 0.0
        %1270 = vmatprep.subr.mxu0 0.0
        %1271 = vmatpush1.msra.mxu0 0.0
        %1272 = vmatprep.subr.mxu0 0.0
        %1273 = vmatpush1.msra.mxu0 0.0
        %1274 = vmatprep.subr.mxu0 0.0
        %1275 = vmatpush1.msra.mxu0 0.0
        %1276 = vmatprep.subr.mxu0 0.0
        %1277 = vmatpush1.msra.mxu0 0.0
        %1278 = vmatprep.subr.mxu0 0.0
        %1279 = vmatpush1.msra.mxu0 0.0
        %1280 = vmatprep.subr.mxu0 0.0
        %1281 = vmatpush1.msra.mxu0 0.0
        %1282 = vmatprep.subr.mxu0 0.0
        %1283 = vmatpush1.msra.mxu0 0.0
        %1284 = vmatprep.subr.mxu0 0.0
        %1285 = vmatpush1.msra.mxu0 0.0
        %1286 = vmatprep.subr.mxu0 0.0
        %1287 = vmatpush1.msra.mxu0 0.0
        %1288 = vmatprep.subr.mxu0 0.0
        %1289 = vmatpush1.msra.mxu0 0.0
        %1290 = vmatprep.subr.mxu0 0.0
        %1291 = vmatpush1.msra.mxu0 0.0
        %1292 = vmatprep.subr.mxu0 0.0
        %1293 = vmatpush1.msra.mxu0 0.0
        %1294 = vmatprep.subr.mxu0 0.0
        %1295 = vmatpush1.msra.mxu0 0.0
        %1296 = vmatprep.mubr.f32.mxu0 0.0
        %1297 = vmatmul.mubr.f32.gmra.mrb[0].mxu0 %v1230
        %v1298 = vpop.f32.mrb[0].mxu0
        %v1299 = vadd.f32 0.0, %v1298
        %v1300 = vpop.f32.mrb[0].mxu0
        %v1301 = vadd.f32 0.0, %v1300
        %1302 = vdwg.mxu0
        %v1303 = vld [vmem:[#allocation3 + $0x5] ss:$0 sm:$0xff]
        %v1304 = vadd.f32 %v1303, %v1299
        %v1305 = vld [vmem:[#allocation3 + $0xa] ss:$0 sm:$0xff]
        %v1306 = vadd.f32 %v1305, %v1301
        %v1307 = vxor.u32 %v1304, 2147483648
        %v1308 = vmul.f32 %v1307, 1.442695
        %v1309 = vpow.pop %v1308
        %v1310 = vadd.f32 %v1309, 1.0
        %v1311 = vrcp.pop %v1310
        %v1312 = vmul.f32 1.0, %v1311
        %v1313 = vtanh.pop %v1304
        %v1314 = vmul.f32 %v1312, %v1187
        %1316 = vrot.lane.b32.xlu0 %v1313, 32
        %v1317 = vpop.permute.xlu0 %1316
        %v1319 = vmul.f32 %v1312, %v1317
        %1321 = vrot.lane.b32.xlu0 %v1319, 32
        %v1322 = vpop.permute.xlu0 %1321
        %v1324 = vadd.f32 %v1314, %v1322
        %v1325 = vtanh.pop %v1324
        %1327 = vrot.lane.b32.xlu0 %v1325, 32
        %v1328 = vpop.permute.xlu0 %1327
        %v1330 = vmul.f32 %v1312, %v1328
        %v1331 = vxor.u32 %v1306, 2147483648
        %v1332 = vmul.f32 %v1331, 1.442695
        %v1333 = vpow.pop %v1332
        %v1334 = vadd.f32 %v1333, 1.0
        %v1335 = vrcp.pop %v1334
        %v1336 = vmul.f32 1.0, %v1335
        %v1337 = vtanh.pop %v1306
        %v1338 = vmul.f32 %v1336, %v1211
        %1340 = vrot.lane.b32.xlu0 %v1337, 32
        %v1341 = vpop.permute.xlu0 %1340
        %v1343 = vmul.f32 %v1336, %v1341
        %1345 = vrot.lane.b32.xlu0 %v1343, 32
        %v1346 = vpop.permute.xlu0 %1345
        %v1348 = vadd.f32 %v1338, %v1346
        %v1349 = vtanh.pop %v1348
        %1351 = vrot.lane.b32.xlu0 %v1349, 32
        %v1352 = vpop.permute.xlu0 %1351
        %v1354 = vmul.f32 %v1336, %v1352
        %1356 = vrot.lane.b32.xlu0 %v1330, 64
        %v1357 = vpop.permute.xlu0 %1356
        %1359 = vst.msk [vmem:[%s670 + $0x5] sm:$0x1] %vm671, %v1357
        %1361 = vrot.lane.b32.xlu0 %v1354, 96
        %v1362 = vpop.permute.xlu0 %1361
        %1364 = vst.msk [vmem:[%s670 + $0x2] sm:$0x1] %vm677, %v1362
        %v1365 = vsel %vm679, %v1357, %v1362
        %v1367 = vsel %vm538, %v1365, 0
        %1369 = vmatprep.subr.mxu0 %v523
        %1370 = vmatpush1.msra.mxu0 %v522
        %1371 = vmatprep.subr.mxu0 %v525
        %1372 = vmatpush1.msra.mxu0 %v524
        %1373 = vmatprep.subr.mxu0 %v527
        %1374 = vmatpush1.msra.mxu0 %v526
        %1375 = vmatprep.subr.mxu0 %v529
        %1376 = vmatpush1.msra.mxu0 %v528
        %1377 = vmatprep.subr.mxu0 %v531
        %1378 = vmatpush1.msra.mxu0 %v530
        %1379 = vmatprep.subr.mxu0 %v533
        %1380 = vmatpush1.msra.mxu0 %v532
        %1381 = vmatprep.subr.mxu0 %v535
        %1382 = vmatpush1.msra.mxu0 %v534
        %1383 = vmatprep.subr.mxu0 %v537
        %1384 = vmatpush1.msra.mxu0 %v536
        %1385 = vmatprep.subr.mxu0 0.0
        %1386 = vmatpush1.msra.mxu0 0.0
        %1387 = vmatprep.subr.mxu0 0.0
        %1388 = vmatpush1.msra.mxu0 0.0
        %1389 = vmatprep.subr.mxu0 0.0
        %1390 = vmatpush1.msra.mxu0 0.0
        %1391 = vmatprep.subr.mxu0 0.0
        %1392 = vmatpush1.msra.mxu0 0.0
        %1393 = vmatprep.subr.mxu0 0.0
        %1394 = vmatpush1.msra.mxu0 0.0
        %1395 = vmatprep.subr.mxu0 0.0
        %1396 = vmatpush1.msra.mxu0 0.0
        %1397 = vmatprep.subr.mxu0 0.0
        %1398 = vmatpush1.msra.mxu0 0.0
        %1399 = vmatprep.subr.mxu0 0.0
        %1400 = vmatpush1.msra.mxu0 0.0
        %1401 = vmatprep.subr.mxu0 0.0
        %1402 = vmatpush1.msra.mxu0 0.0
        %1403 = vmatprep.subr.mxu0 0.0
        %1404 = vmatpush1.msra.mxu0 0.0
        %1405 = vmatprep.subr.mxu0 0.0
        %1406 = vmatpush1.msra.mxu0 0.0
        %1407 = vmatprep.subr.mxu0 0.0
        %1408 = vmatpush1.msra.mxu0 0.0
        %1409 = vmatprep.subr.mxu0 0.0
        %1410 = vmatpush1.msra.mxu0 0.0
        %1411 = vmatprep.subr.mxu0 0.0
        %1412 = vmatpush1.msra.mxu0 0.0
        %1413 = vmatprep.subr.mxu0 0.0
        %1414 = vmatpush1.msra.mxu0 0.0
        %1415 = vmatprep.subr.mxu0 0.0
        %1416 = vmatpush1.msra.mxu0 0.0
        %1417 = vmatprep.subr.mxu0 0.0
        %1418 = vmatpush1.msra.mxu0 0.0
        %1419 = vmatprep.subr.mxu0 0.0
        %1420 = vmatpush1.msra.mxu0 0.0
        %1421 = vmatprep.subr.mxu0 0.0
        %1422 = vmatpush1.msra.mxu0 0.0
        %1423 = vmatprep.subr.mxu0 0.0
        %1424 = vmatpush1.msra.mxu0 0.0
        %1425 = vmatprep.subr.mxu0 0.0
        %1426 = vmatpush1.msra.mxu0 0.0
        %1427 = vmatprep.subr.mxu0 0.0
        %1428 = vmatpush1.msra.mxu0 0.0
        %1429 = vmatprep.subr.mxu0 0.0
        %1430 = vmatpush1.msra.mxu0 0.0
        %1431 = vmatprep.subr.mxu0 0.0
        %1432 = vmatpush1.msra.mxu0 0.0
        %1433 = vmatprep.mubr.f32.mxu0 0.0
        %1434 = vmatmul.mubr.f32.gmra.mrb[0].mxu0 %v1367
        %v1435 = vpop.f32.mrb[0].mxu0
        %v1436 = vadd.f32 0.0, %v1435
        %v1437 = vpop.f32.mrb[0].mxu0
        %v1438 = vadd.f32 0.0, %v1437
        %1439 = vdwg.mxu0
        %v1440 = vld [vmem:[#allocation3 + $0x6] ss:$0 sm:$0xff]
        %v1441 = vadd.f32 %v1440, %v1436
        %v1442 = vld [vmem:[#allocation3 + $0x9] ss:$0 sm:$0xff]
        %v1443 = vadd.f32 %v1442, %v1438
        %v1444 = vxor.u32 %v1441, 2147483648
        %v1445 = vmul.f32 %v1444, 1.442695
        %v1446 = vpow.pop %v1445
        %v1447 = vadd.f32 %v1446, 1.0
        %v1448 = vrcp.pop %v1447
        %v1449 = vmul.f32 1.0, %v1448
        %v1450 = vtanh.pop %v1441
        %v1451 = vmul.f32 %v1449, %v1324
        %1453 = vrot.lane.b32.xlu0 %v1450, 32
        %v1454 = vpop.permute.xlu0 %1453
        %v1456 = vmul.f32 %v1449, %v1454
        %1458 = vrot.lane.b32.xlu0 %v1456, 32
        %v1459 = vpop.permute.xlu0 %1458
        %v1461 = vadd.f32 %v1451, %v1459
        %v1462 = vtanh.pop %v1461
        %1464 = vrot.lane.b32.xlu0 %v1462, 32
        %v1465 = vpop.permute.xlu0 %1464
        %v1467 = vmul.f32 %v1449, %v1465
        %v1468 = vxor.u32 %v1443, 2147483648
        %v1469 = vmul.f32 %v1468, 1.442695
        %v1470 = vpow.pop %v1469
        %v1471 = vadd.f32 %v1470, 1.0
        %v1472 = vrcp.pop %v1471
        %v1473 = vmul.f32 1.0, %v1472
        %v1474 = vtanh.pop %v1443
        %v1475 = vmul.f32 %v1473, %v1348
        %1477 = vrot.lane.b32.xlu0 %v1474, 32
        %v1478 = vpop.permute.xlu0 %1477
        %v1480 = vmul.f32 %v1473, %v1478
        %1482 = vrot.lane.b32.xlu0 %v1480, 32
        %v1483 = vpop.permute.xlu0 %1482
        %v1485 = vadd.f32 %v1475, %v1483
        %v1486 = vtanh.pop %v1485
        %1488 = vrot.lane.b32.xlu0 %v1486, 32
        %v1489 = vpop.permute.xlu0 %1488
        %v1491 = vmul.f32 %v1473, %v1489
        %1493 = vrot.lane.b32.xlu0 %v1467, 64
        %v1494 = vpop.permute.xlu0 %1493
        %1496 = vst.msk [vmem:[%s670 + $0x6] sm:$0x1] %vm671, %v1494
        %1498 = vrot.lane.b32.xlu0 %v1491, 96
        %v1499 = vpop.permute.xlu0 %1498
        %1501 = vst.msk [vmem:[%s670 + $0x1] sm:$0x1] %vm677, %v1499
        %v1502 = vsel %vm679, %v1494, %v1499
        %v1504 = vsel %vm538, %v1502, 0
        %1506 = vmatprep.subr.mxu0 %v523
        %1507 = vmatpush1.msra.mxu0 %v522
        %1508 = vmatprep.subr.mxu0 %v525
        %1509 = vmatpush1.msra.mxu0 %v524
        %1510 = vmatprep.subr.mxu0 %v527
        %1511 = vmatpush1.msra.mxu0 %v526
        %1512 = vmatprep.subr.mxu0 %v529
        %1513 = vmatpush1.msra.mxu0 %v528
        %1514 = vmatprep.subr.mxu0 %v531
        %1515 = vmatpush1.msra.mxu0 %v530
        %1516 = vmatprep.subr.mxu0 %v533
        %1517 = vmatpush1.msra.mxu0 %v532
        %1518 = vmatprep.subr.mxu0 %v535
        %1519 = vmatpush1.msra.mxu0 %v534
        %1520 = vmatprep.subr.mxu0 %v537
        %1521 = vmatpush1.msra.mxu0 %v536
        %1522 = vmatprep.subr.mxu0 0.0
        %1523 = vmatpush1.msra.mxu0 0.0
        %1524 = vmatprep.subr.mxu0 0.0
        %1525 = vmatpush1.msra.mxu0 0.0
        %1526 = vmatprep.subr.mxu0 0.0
        %1527 = vmatpush1.msra.mxu0 0.0
        %1528 = vmatprep.subr.mxu0 0.0
        %1529 = vmatpush1.msra.mxu0 0.0
        %1530 = vmatprep.subr.mxu0 0.0
        %1531 = vmatpush1.msra.mxu0 0.0
        %1532 = vmatprep.subr.mxu0 0.0
        %1533 = vmatpush1.msra.mxu0 0.0
        %1534 = vmatprep.subr.mxu0 0.0
        %1535 = vmatpush1.msra.mxu0 0.0
        %1536 = vmatprep.subr.mxu0 0.0
        %1537 = vmatpush1.msra.mxu0 0.0
        %1538 = vmatprep.subr.mxu0 0.0
        %1539 = vmatpush1.msra.mxu0 0.0
        %1540 = vmatprep.subr.mxu0 0.0
        %1541 = vmatpush1.msra.mxu0 0.0
        %1542 = vmatprep.subr.mxu0 0.0
        %1543 = vmatpush1.msra.mxu0 0.0
        %1544 = vmatprep.subr.mxu0 0.0
        %1545 = vmatpush1.msra.mxu0 0.0
        %1546 = vmatprep.subr.mxu0 0.0
        %1547 = vmatpush1.msra.mxu0 0.0
        %1548 = vmatprep.subr.mxu0 0.0
        %1549 = vmatpush1.msra.mxu0 0.0
        %1550 = vmatprep.subr.mxu0 0.0
        %1551 = vmatpush1.msra.mxu0 0.0
        %1552 = vmatprep.subr.mxu0 0.0
        %1553 = vmatpush1.msra.mxu0 0.0
        %1554 = vmatprep.subr.mxu0 0.0
        %1555 = vmatpush1.msra.mxu0 0.0
        %1556 = vmatprep.subr.mxu0 0.0
        %1557 = vmatpush1.msra.mxu0 0.0
        %1558 = vmatprep.subr.mxu0 0.0
        %1559 = vmatpush1.msra.mxu0 0.0
        %1560 = vmatprep.subr.mxu0 0.0
        %1561 = vmatpush1.msra.mxu0 0.0
        %1562 = vmatprep.subr.mxu0 0.0
        %1563 = vmatpush1.msra.mxu0 0.0
        %1564 = vmatprep.subr.mxu0 0.0
        %1565 = vmatpush1.msra.mxu0 0.0
        %1566 = vmatprep.subr.mxu0 0.0
        %1567 = vmatpush1.msra.mxu0 0.0
        %1568 = vmatprep.subr.mxu0 0.0
        %1569 = vmatpush1.msra.mxu0 0.0
        %1570 = vmatprep.mubr.f32.mxu0 0.0
        %1571 = vmatmul.mubr.f32.gmra.mrb[0].mxu0 %v1504
        %v1572 = vpop.f32.mrb[0].mxu0
        %v1573 = vadd.f32 0.0, %v1572
        %v1574 = vpop.f32.mrb[0].mxu0
        %v1575 = vadd.f32 0.0, %v1574
        %1576 = vdwg.mxu0
        %v1577 = vld [vmem:[#allocation3 + $0x7] ss:$0 sm:$0xff]
        %v1578 = vadd.f32 %v1577, %v1573
        %v1579 = vld [vmem:[#allocation3 + $0x8] ss:$0 sm:$0xff]
        %v1580 = vadd.f32 %v1579, %v1575
        %v1581 = vxor.u32 %v1578, 2147483648
        %v1582 = vmul.f32 %v1581, 1.442695
        %v1583 = vpow.pop %v1582
        %v1584 = vadd.f32 %v1583, 1.0
        %v1585 = vrcp.pop %v1584
        %v1586 = vmul.f32 1.0, %v1585
        %v1587 = vtanh.pop %v1578
        %v1588 = vmul.f32 %v1586, %v1461
        %1590 = vrot.lane.b32.xlu0 %v1587, 32
        %v1591 = vpop.permute.xlu0 %1590
        %v1593 = vmul.f32 %v1586, %v1591
        %1595 = vrot.lane.b32.xlu0 %v1593, 32
        %v1596 = vpop.permute.xlu0 %1595
        %v1598 = vadd.f32 %v1588, %v1596
        %v1599 = vtanh.pop %v1598
        %1601 = vrot.lane.b32.xlu0 %v1599, 32
        %v1602 = vpop.permute.xlu0 %1601
        %v1604 = vmul.f32 %v1586, %v1602
        %v1605 = vxor.u32 %v1580, 2147483648
        %v1606 = vmul.f32 %v1605, 1.442695
        %v1607 = vpow.pop %v1606
        %v1608 = vadd.f32 %v1607, 1.0
        %v1609 = vrcp.pop %v1608
        %v1610 = vmul.f32 1.0, %v1609
        %v1611 = vtanh.pop %v1580
        %v1612 = vmul.f32 %v1610, %v1485
        %1614 = vrot.lane.b32.xlu0 %v1611, 32
        %v1615 = vpop.permute.xlu0 %1614
        %v1617 = vmul.f32 %v1610, %v1615
        %1619 = vrot.lane.b32.xlu0 %v1617, 32
        %v1620 = vpop.permute.xlu0 %1619
        %v1622 = vadd.f32 %v1612, %v1620
        %v1623 = vtanh.pop %v1622
        %1625 = vrot.lane.b32.xlu0 %v1623, 32
        %v1626 = vpop.permute.xlu0 %1625
        %v1628 = vmul.f32 %v1610, %v1626
        %1630 = vrot.lane.b32.xlu0 %v1604, 64
        %v1631 = vpop.permute.xlu0 %1630
        %1633 = vst.msk [vmem:[%s670 + $0x7] sm:$0x1] %vm671, %v1631
        %1635 = vrot.lane.b32.xlu0 %v1628, 96
        %v1636 = vpop.permute.xlu0 %1635
        %1638 = vst.msk [vmem:[%s670] sm:$0x1] %vm677, %v1636
        %p1639 = scmp.eq.s32.totalorder %s22, 1
        // Predicated region
        $region53: #{encoder_bilstm_forward.1} parent=35 // pred_check
          %p1640 = pneg %p1639
        $region54: #{encoder_bilstm_forward.1} parent=35 // pred_check_branch
          %1642 = sbr.rel (%p1640) target = $region56
        $region55: #{encoder_bilstm_forward.1} parent=35 // pred_region
          %v1643 = vld [vmem:[%s670] sm:$0xff]
          %1644 = vst [vmem:[#allocation9] sm:$0xff] %v1643
        $region56: #{encoder_bilstm_forward.1} parent=35 // pred_fallthru
          _
        // Predicated region
        $region57: #{encoder_bilstm_forward.1} parent=35 // pred_check
          %p1645 = pneg %p134
        $region58: #{encoder_bilstm_forward.1} parent=35 // pred_check_branch
          %1647 = sbr.rel (%p1645) target = $region60
        $region59: #{encoder_bilstm_forward.1} parent=35 // pred_region
          %s1649 = ssub.s32 128, 128
          %1650 = vsyncadd [#allocation6], %s1649
          %s1652 = sshll.u32 [#allocation9], 4
          %s1653 = int_to_ptr.vmem [resolvable:$true] %s1652
          %1655 = dma.vmem_to_hbm [thread:$0]  %s1653, 128, %s4, [#allocation6]
        $region60: #{encoder_bilstm_forward.1} parent=35 // pred_fallthru
          _
        // Predicated region
        $region61: #{encoder_bilstm_forward.1} parent=35 // pred_check
          %p1656 = pneg %p134
        $region62: #{encoder_bilstm_forward.1} parent=35 // pred_check_branch
          %1658 = sbr.rel (%p1656) target = $region64
        $region63: #{encoder_bilstm_forward.1} parent=35 // pred_region
          %1659 = dma.done [#allocation6], 128
        $region64: #{encoder_bilstm_forward.1} parent=35 // pred_fallthru
          _
      $region36: #{encoder_bilstm_forward.1} parent=5 // pred_fallthru
        _
      %p1660 = scmp.le.s32.totalorder 2, %s17
      // Predicated region
      $region65: #{encoder_bilstm_forward.1} parent=5 // pred_check
        %p1661 = pneg %p1660
      $region66: #{encoder_bilstm_forward.1} parent=5 // pred_check_branch
        %1663 = sbr.rel (%p1661) target = $region68
      $region67: #{encoder_bilstm_forward.1} parent=5 // pred_region
        %s1664 = ssub.s32 %s17, 2
      $region68: #{encoder_bilstm_forward.1} parent=5 // pred_fallthru
        _
    $region6: #{encoder_bilstm_forward.1} parent=1 // loop_footer
      %s21 = sadd.s32 1, %s17
    $region7: #{encoder_bilstm_forward.1} parent=1 // loop_footer_branch
      %16 = sbr.rel target = $region3
    $region8: #{encoder_bilstm_forward.1} parent=1 // loop_exit
      _
    %1665 = vsyncpa [#allocation5], 1
    %s1666 = scalar_lea.sflag [#allocation5], 1
    %1667 = vsyncpa %s1666, 1
    %1668 = vsyncpa [#allocation8], 1
    %s1669 = scalar_lea.sflag [#allocation8], 1
    %1670 = vsyncpa %s1669, 1
    %1671 = vsyncpa [#allocation6], 1
    %s1672 = scalar_lea.sflag [#allocation6], 1
    %1673 = vsyncpa %s1672, 1

</llo_original>
